<compile_context>
chip_gen: v7x
topology: tpu7x:2x2x1
jax: 0.10.0
libtpu: 0.0.40
codegen_flags: <defaults>
</compile_context>

<pallas_src>
import functools
import math

import jax
import jax.numpy as jnp
from jax import lax
from jax.experimental import pallas as pl
from jax.experimental.pallas import tpu as pltpu


# ----------------------------------------------------------------------------
# Tile / VMEM planning
# ----------------------------------------------------------------------------
def _bytes(a):
    return a.size * a.dtype.itemsize


def _plan_tiles(n_rows, stream_row_bytes, resident_bytes, requested):
    """Pick a row tile and a scoped-VMEM limit that is safe on v5e/v6e/v7x."""
    budget = 24 * 1024 * 1024  # headroom under v7x's 64 MiB physical VMEM
    tile = requested if n_rows > requested else n_rows

    def usage(t):  # double-buffered row streams + double-buffered resident blocks
        return 2 * t * stream_row_bytes + 2 * resident_bytes

    # Shrink in powers of two but never below 128 (keeps (8,128) divisibility).
    while tile < n_rows and tile % 256 == 0 and usage(tile) > budget:
        tile //= 2
    vmem_limit = int(min(max(usage(tile) * 2 + (4 << 20), 32 << 20), 60 << 20))
    return tile, vmem_limit


# ----------------------------------------------------------------------------
# In-kernel MLP: [Linear -> ReLU]* -> Linear -> (LayerNorm)
# Consumes parameter refs from `it` in the order produced by _pack_mlp_params.
# First-layer weight is split per input segment (logical concat, no copy).
# ----------------------------------------------------------------------------
def _run_mlp(seg_acts, it, n_layers, use_layer_norm, ln_dim=None, eps=1e-5):
    h = None
    for seg in seg_acts:
        w = next(it)[...].astype(jnp.float32)
        part = jnp.dot(seg, w, preferred_element_type=jnp.float32)
        h = part if h is None else h + part
    h = h + next(it)[...].astype(jnp.float32)  # bias 0
    if n_layers > 1:
        h = jnp.maximum(h, 0.0)

    for layer in range(1, n_layers):
        w = next(it)[...].astype(jnp.float32)
        b = next(it)[...].astype(jnp.float32)
        h = jnp.dot(h, w, preferred_element_type=jnp.float32) + b
        if layer < n_layers - 1:
            h = jnp.maximum(h, 0.0)

    if use_layer_norm:
        gamma = next(it)[...].astype(jnp.float32)
        beta = next(it)[...].astype(jnp.float32)
        d_pad = h.shape[-1]
        if ln_dim is None or ln_dim == d_pad:
            mean = jnp.mean(h, axis=-1, keepdims=True)
            diff = h - mean
            var = jnp.mean(diff * diff, axis=-1, keepdims=True)
        else:
            # Lane-padded output: normalize only the first ln_dim (real)
            # columns; padded columns (zero weights/bias/gamma/beta) stay 0.
            mask = (lax.broadcasted_iota(jnp.int32, h.shape, 1) < ln_dim
                    ).astype(jnp.float32)
            inv_d = 1.0 / float(ln_dim)
            mean = jnp.sum(h * mask, axis=-1, keepdims=True) * inv_d
            diff = (h - mean) * mask
            var = jnp.sum(diff * diff, axis=-1, keepdims=True) * inv_d
        h = diff * lax.rsqrt(var + eps) * gamma + beta
    return h


def _pack_mlp_params(params, seg_widths, use_layer_norm, pad_out_to=None):
    """Inputs + BlockSpecs for one MLP's parameters (resident, full blocks),
    with the first-layer weight split per segment and optional lane padding
    of the last layer."""
    weights = list(params["weights"])
    biases = list(params["biases"])
    gamma = params.get("gamma")
    beta = params.get("beta")
    out_dim = weights[-1].shape[1]
    if pad_out_to is not None and pad_out_to > out_dim:
        pad = pad_out_to - out_dim
        weights[-1] = jnp.pad(weights[-1], ((0, 0), (0, pad)))
        biases[-1] = jnp.pad(biases[-1], ((0, pad),))
        if use_layer_norm:
            gamma = jnp.pad(gamma, ((0, pad),))
            beta = jnp.pad(beta, ((0, pad),))

    inputs, specs = [], []

    def add(a):
        inputs.append(a)
        specs.append(pl.BlockSpec(a.shape, lambda i: (0, 0)))

    off = 0
    for w_ in seg_widths:
        add(weights[0][off:off + w_, :])
        off += w_
    assert off == weights[0].shape[0]
    add(biases[0].reshape(1, -1))
    for w, b in zip(weights[1:], biases[1:]):
        add(w)
        add(b.reshape(1, -1))
    if use_layer_norm:
        add(gamma.reshape(1, -1))
        add(beta.reshape(1, -1))
    return inputs, specs


# ----------------------------------------------------------------------------
# Kernel A: fused edges-MLP + message-MLP + scatter-add (sum over receivers).
# ----------------------------------------------------------------------------
def _edge_message_kernel(*refs, edges_layers, msg_layers, use_layer_norm,
                         n_edges, eps=1e-5):
    acc_ref = refs[-1]   # (R, d) f32 VMEM scratch, resident across edge tiles
    out_ref = refs[-2]   # (R, d) output, constant block index across the grid
    it = iter(refs[:-2])
    e_attr = next(it)[...].astype(jnp.float32)   # (T, edges_dim)
    x_i = next(it)[...].astype(jnp.float32)      # (T, latent)  grid[recv]
    x_j = next(it)[...].astype(jnp.float32)      # (T, latent)  mesh[send]
    rcv = next(it)[...]                          # (1, T) int32 receiver ids

    @pl.when(pl.program_id(0) == 0)
    def _init():
        acc_ref[...] = jnp.zeros_like(acc_ref)

    # Edge-embedding MLP (fused: embeddings never leave VMEM).
    e_emb = _run_mlp([e_attr], it, edges_layers, use_layer_norm, eps=eps)
    # Message MLP over logical concat [x_i, x_j, e_emb] (weights pre-split).
    h = _run_mlp([x_i, x_j, e_emb], it, msg_layers, use_layer_norm, eps=eps)

    # Zero out messages from padded (out-of-range) edges in the last tile so
    # garbage/NaN cannot pollute the accumulation.
    tile = h.shape[0]
    first_edge = pl.program_id(0) * tile
    valid_row = (first_edge
                 + lax.broadcasted_iota(jnp.int32, (tile, 1), 0)) < n_edges
    h = jnp.where(valid_row, h, 0.0)

    # Scatter-add via MXU: acc[r, :] += sum_{t : recv[t]==r} h[t, :]
    n_recv = acc_ref.shape[0]
    rows = lax.broadcasted_iota(jnp.int32, (n_recv, tile), 0)
    cols = lax.broadcasted_iota(jnp.int32, (n_recv, tile), 1)
    onehot = jnp.where((rows == rcv) & (first_edge + cols < n_edges), 1.0, 0.0)
    acc_ref[...] += jnp.dot(onehot, h, preferred_element_type=jnp.float32)

    @pl.when(pl.program_id(0) == pl.num_programs(0) - 1)
    def _finalize():
        out_ref[...] = acc_ref[...].astype(out_ref.dtype)


def edge_message_aggregate(edge_attr, x_i, x_j, recv_idx, num_receivers,
                           edges_params, msg_params, *, use_layer_norm=True,
                           edge_tile=512):
    """Fused: edges MLP -> InteractionNetwork message MLP -> sum aggregation."""
    n_edges = edge_attr.shape[0]
    dtype = x_i.dtype
    d_e, d_i, d_j = edge_attr.shape[1], x_i.shape[1], x_j.shape[1]
    d_emb = edges_params["weights"][-1].shape[1]
    d_out = msg_params["weights"][-1].shape[1]

    e_inputs, e_specs = _pack_mlp_params(edges_params, [d_e], use_layer_norm)
    m_inputs, m_specs = _pack_mlp_params(msg_params, [d_i, d_j, d_emb],
                                         use_layer_norm)

    stream_row_bytes = (d_e + d_i + d_j) * dtype.itemsize + 4  # + recv int32
    resident = sum(_bytes(a) for a in e_inputs + m_inputs)
    resident += 2 * num_receivers * d_out * dtype.itemsize  # resident out block
    resident += num_receivers * d_out * 4                   # f32 accumulator
    tile, vmem_limit = _plan_tiles(n_edges, stream_row_bytes, resident,
                                   edge_tile)

    recv2d = recv_idx.reshape(1, n_edges).astype(jnp.int32)
    grid = (pl.cdiv(n_edges, tile),)

    inputs = [edge_attr, x_i, x_j, recv2d] + e_inputs + m_inputs
    in_specs = [pl.BlockSpec((tile, d_e), lambda i: (i, 0)),
                pl.BlockSpec((tile, d_i), lambda i: (i, 0)),
                pl.BlockSpec((tile, d_j), lambda i: (i, 0)),
                pl.BlockSpec((1, tile), lambda i: (0, i))] + e_specs + m_specs

    kernel = functools.partial(
        _edge_message_kernel,
        edges_layers=len(edges_params["weights"]),
        msg_layers=len(msg_params["weights"]),
        use_layer_norm=use_layer_norm, n_edges=n_edges)

    # TODO(synk): at production scale (num_receivers * d_out too big for VMEM),
    # pre-sort edges by receiver and tile the receiver axis with
    # scalar-prefetched segment offsets instead of one resident accumulator.
    return pl.pallas_call(
        kernel,
        out_shape=jax.ShapeDtypeStruct((num_receivers, d_out), dtype),
        grid=grid,
        in_specs=in_specs,
        out_specs=pl.BlockSpec((num_receivers, d_out), lambda i: (0, 0)),
        scratch_shapes=[pltpu.VMEM((num_receivers, d_out), jnp.float32)],
        compiler_params=pltpu.CompilerParams(
            dimension_semantics=("arbitrary",),
            vmem_limit_bytes=vmem_limit),
    )(*inputs)


# ----------------------------------------------------------------------------
# Kernel B: fused node-update MLP (+ residual) + final grid MLP.
# ----------------------------------------------------------------------------
def _node_update_kernel(*refs, node_layers, final_layers, use_layer_norm,
                        out_dim, eps=1e-5):
    out_ref = refs[-1]
    it = iter(refs[:-1])
    grid_x = next(it)[...].astype(jnp.float32)   # (T, latent)
    aggr = next(it)[...].astype(jnp.float32)     # (T, latent)

    h = _run_mlp([grid_x, aggr], it, node_layers, use_layer_norm, eps=eps)
    latent = grid_x + h                          # residual (Decoder-level)
    y = _run_mlp([latent], it, final_layers, use_layer_norm, ln_dim=out_dim,
                 eps=eps)
    out_ref[...] = y.astype(out_ref.dtype)


def node_update_final(grid_nodes, aggr, node_params, final_params, *,
                      use_layer_norm=True, tile_rows=512):
    """Fused: latent = grid + MLP_nodes([grid, aggr]); out = MLP_final(latent)."""
    n = grid_nodes.shape[0]
    dtype = grid_nodes.dtype
    d_g, d_a = grid_nodes.shape[1], aggr.shape[1]
    out_dim = final_params["weights"][-1].shape[1]
    out_pad = ((out_dim + 127) // 128) * 128   # lane-dense stores

    n_inputs, n_specs = _pack_mlp_params(node_params, [d_g, d_a],
                                         use_layer_norm)
    f_inputs, f_specs = _pack_mlp_params(final_params, [d_g], use_layer_norm,
                                         pad_out_to=out_pad)

    stream_row_bytes = (d_g + d_a + out_pad) * dtype.itemsize
    resident = sum(_bytes(a) for a in n_inputs + f_inputs)
    tile, vmem_limit = _plan_tiles(n, stream_row_bytes, resident, tile_rows)

    grid = (pl.cdiv(n, tile),)
    inputs = [grid_nodes, aggr] + n_inputs + f_inputs
    in_specs = [pl.BlockSpec((tile, d_g), lambda i: (i, 0)),
                pl.BlockSpec((tile, d_a), lambda i: (i, 0))] + n_specs + f_specs

    kernel = functools.partial(
        _node_update_kernel,
        node_layers=len(node_params["weights"]),
        final_layers=len(final_params["weights"]),
        use_layer_norm=use_layer_norm, out_dim=out_dim)

    out = pl.pallas_call(
        kernel,
        out_shape=jax.ShapeDtypeStruct((n, out_pad), dtype),
        grid=grid,
        in_specs=in_specs,
        out_specs=pl.BlockSpec((tile, out_pad), lambda i: (i, 0)),
        compiler_params=pltpu.CompilerParams(
            dimension_semantics=("parallel",),
            vmem_limit_bytes=vmem_limit),
    )(*inputs)
    if out_pad != out_dim:
        out = out[:, :out_dim]
    return out


# ----------------------------------------------------------------------------
# Parameter init (mirrors torch.nn.Linear / LayerNorm shapes)
# ----------------------------------------------------------------------------
def init_mlp_params(key, input_dim, hidden_dims, use_layer_norm=True):
    dims = [input_dim] + list(hidden_dims)
    weights, biases = [], []
    for i in range(len(hidden_dims)):
        key, wk, bk = jax.random.split(key, 3)
        bound = 1.0 / math.sqrt(dims[i])
        weights.append(jax.random.uniform(wk, (dims[i], dims[i + 1]),
                                          jnp.float32, -bound, bound))
        biases.append(jax.random.uniform(bk, (dims[i + 1],),
                                         jnp.float32, -bound, bound))
    params = {"weights": weights, "biases": biases}
    if use_layer_norm:
        params["gamma"] = jnp.ones((hidden_dims[-1],), jnp.float32)
        params["beta"] = jnp.zeros((hidden_dims[-1],), jnp.float32)
    return params


def init_decoder_params(key, edges_dim, output_dim, hidden_dims):
    latent = hidden_dims[-1]
    k1, k2, k3, k4 = jax.random.split(key, 4)
    return {
        "edges_mlp": init_mlp_params(k1, edges_dim, hidden_dims),
        "gnn_mlp_edges": init_mlp_params(k2, 3 * latent, hidden_dims),
        "gnn_mlp_nodes": init_mlp_params(k3, 2 * latent, hidden_dims),
        "grid_mlp_final": init_mlp_params(k4, latent,
                                          hidden_dims[:-1] + [output_dim]),
    }


# ----------------------------------------------------------------------------
# Decoder forward
# ----------------------------------------------------------------------------
def decoder_forward(params, mesh_nodes, grid_nodes, edge_attr, edge_index):
    senders = edge_index[0]     # mesh node indices (source)
    receivers = edge_index[1]   # grid node indices (target)

    # TODO(synk): fuse these row gathers into the edge kernel via
    # scalar-prefetched per-tile DMA gather to avoid materializing E x latent
    # gathered copies in HBM.
    x_i = jnp.take(grid_nodes, receivers, axis=0)
    x_j = jnp.take(mesh_nodes, senders, axis=0)

    # Kernel A: edges MLP + message MLP + sum aggregation, all fused.
    aggr = edge_message_aggregate(edge_attr, x_i, x_j, receivers,
                                  grid_nodes.shape[0],
                                  params["edges_mlp"],
                                  params["gnn_mlp_edges"])

    # Kernel B: node update MLP + residual + final grid MLP, all fused.
    return node_update_final(grid_nodes, aggr, params["gnn_mlp_nodes"],
                             params["grid_mlp_final"])


# ----------------------------------------------------------------------------
# Pure-JAX reference (for correctness check)
# ----------------------------------------------------------------------------
def _mlp_ref(x, params, use_layer_norm=True, eps=1e-5):
    h = x
    ws, bs = params["weights"], params["biases"]
    for i, (w, b) in enumerate(zip(ws, bs)):
        h = jnp.dot(h, w, precision=lax.Precision.HIGHEST) + b
        if i < len(ws) - 1:
            h = jnp.maximum(h, 0.0)
    if use_layer_norm:
        mean = jnp.mean(h, -1, keepdims=True)
        var = jnp.mean((h - mean) ** 2, -1, keepdims=True)
        h = (h - mean) / jnp.sqrt(var + eps)
        h = h * params["gamma"] + params["beta"]
    return h


def _decoder_ref(params, mesh, grid, edge_attr, edge_index):
    edges_emb = _mlp_ref(edge_attr, params["edges_mlp"])
    x_i = grid[edge_index[1]]
    x_j = mesh[edge_index[0]]
    messages = _mlp_ref(jnp.concatenate([x_i, x_j, edges_emb], -1),
                        params["gnn_mlp_edges"])
    aggr = jnp.zeros((grid.shape[0], messages.shape[1]), messages.dtype)
    aggr = aggr.at[edge_index[1]].add(messages)
    gnn_out = _mlp_ref(jnp.concatenate([grid, aggr], -1),
                       params["gnn_mlp_nodes"])
    latent = grid + gnn_out
    return _mlp_ref(latent, params["grid_mlp_final"])


if __name__ == "__main__":
    # Small, decoder-consistent shapes.
    edges_dim = 8
    output_dim = 4
    hidden_dims = [32, 16]
    latent_dim = hidden_dims[-1]
    n_mesh, n_grid, n_edges = 24, 16, 64

    key = jax.random.PRNGKey(0)
    kp, km, kg, ke, ks, kr = jax.random.split(key, 6)

    params = init_decoder_params(kp, edges_dim, output_dim, hidden_dims)
    input_mesh_nodes = jax.random.normal(km, (n_mesh, latent_dim), jnp.float32)
    input_grid_nodes = jax.random.normal(kg, (n_grid, latent_dim), jnp.float32)
    input_edge_attr = jax.random.normal(ke, (n_edges, edges_dim), jnp.float32)
    edge_index = jnp.stack(
        [
            jax.random.randint(ks, (n_edges,), 0, n_mesh, dtype=jnp.int32),  # senders
            jax.random.randint(kr, (n_edges,), 0, n_grid, dtype=jnp.int32),  # receivers
        ],
        axis=0,
    )

    out = decoder_forward(params, input_mesh_nodes, input_grid_nodes,
                          input_edge_attr, edge_index)
    out = jax.block_until_ready(out)

    ref = _decoder_ref(params, input_mesh_nodes, input_grid_nodes,
                       input_edge_attr, edge_index)
    assert out.shape == (n_grid, output_dim), out.shape
    assert jnp.allclose(out, ref, atol=5e-3, rtol=5e-3), float(
        jnp.max(jnp.abs(out - ref)))

    print("KERNEL_OK")
</pallas_src>

<mosaic_0001>
module attributes {stable_mosaic.version = 11 : i64} {
  func.func @_edge_message_kernel(%arg0: i32, %arg1: memref<64x8xf32, #tpu.memory_space<vmem>>, %arg2: memref<64x16xf32, #tpu.memory_space<vmem>>, %arg3: memref<64x16xf32, #tpu.memory_space<vmem>>, %arg4: memref<1x64xi32, #tpu.memory_space<vmem>>, %arg5: memref<8x32xf32, #tpu.memory_space<vmem>>, %arg6: memref<1x32xf32, #tpu.memory_space<vmem>>, %arg7: memref<32x16xf32, #tpu.memory_space<vmem>>, %arg8: memref<1x16xf32, #tpu.memory_space<vmem>>, %arg9: memref<1x16xf32, #tpu.memory_space<vmem>>, %arg10: memref<1x16xf32, #tpu.memory_space<vmem>>, %arg11: memref<16x32xf32, #tpu.memory_space<vmem>>, %arg12: memref<16x32xf32, #tpu.memory_space<vmem>>, %arg13: memref<16x32xf32, #tpu.memory_space<vmem>>, %arg14: memref<1x32xf32, #tpu.memory_space<vmem>>, %arg15: memref<32x16xf32, #tpu.memory_space<vmem>>, %arg16: memref<1x16xf32, #tpu.memory_space<vmem>>, %arg17: memref<1x16xf32, #tpu.memory_space<vmem>>, %arg18: memref<1x16xf32, #tpu.memory_space<vmem>>, %arg19: memref<16x16xf32, #tpu.memory_space<vmem>>, %arg20: memref<16x16xf32, #tpu.memory_space<vmem>>) attributes {dimension_semantics = [#tpu.dimension_semantics<arbitrary>], iteration_bounds = array<i64: 1>, scalar_prefetch = 0 : i64, scratch_operands = 1 : i64, tpu.core_type = #tpu.core_type<tc>, window_params = [{transform_indices = @transform_0, window_bounds = array<i64: 64, 8>}, {transform_indices = @transform_1, window_bounds = array<i64: 64, 16>}, {transform_indices = @transform_2, window_bounds = array<i64: 64, 16>}, {transform_indices = @transform_3, window_bounds = array<i64: 1, 64>}, {pipeline_mode = #tpu.pipeline_mode<synchronous>, transform_indices = @transform_4, window_bounds = array<i64: 8, 32>}, {pipeline_mode = #tpu.pipeline_mode<synchronous>, transform_indices = @transform_5, window_bounds = array<i64: 1, 32>}, {pipeline_mode = #tpu.pipeline_mode<synchronous>, transform_indices = @transform_6, window_bounds = array<i64: 32, 16>}, {pipeline_mode = #tpu.pipeline_mode<synchronous>, transform_indices = @transform_7, window_bounds = array<i64: 1, 16>}, {pipeline_mode = #tpu.pipeline_mode<synchronous>, transform_indices = @transform_8, window_bounds = array<i64: 1, 16>}, {pipeline_mode = #tpu.pipeline_mode<synchronous>, transform_indices = @transform_9, window_bounds = array<i64: 1, 16>}, {pipeline_mode = #tpu.pipeline_mode<synchronous>, transform_indices = @transform_10, window_bounds = array<i64: 16, 32>}, {pipeline_mode = #tpu.pipeline_mode<synchronous>, transform_indices = @transform_11, window_bounds = array<i64: 16, 32>}, {pipeline_mode = #tpu.pipeline_mode<synchronous>, transform_indices = @transform_12, window_bounds = array<i64: 16, 32>}, {pipeline_mode = #tpu.pipeline_mode<synchronous>, transform_indices = @transform_13, window_bounds = array<i64: 1, 32>}, {pipeline_mode = #tpu.pipeline_mode<synchronous>, transform_indices = @transform_14, window_bounds = array<i64: 32, 16>}, {pipeline_mode = #tpu.pipeline_mode<synchronous>, transform_indices = @transform_15, window_bounds = array<i64: 1, 16>}, {pipeline_mode = #tpu.pipeline_mode<synchronous>, transform_indices = @transform_16, window_bounds = array<i64: 1, 16>}, {pipeline_mode = #tpu.pipeline_mode<synchronous>, transform_indices = @transform_17, window_bounds = array<i64: 1, 16>}, {pipeline_mode = #tpu.pipeline_mode<synchronous>, transform_indices = @transform_18, window_bounds = array<i64: 16, 16>}]} {
    %c0 = arith.constant 0 : index
    %c0_0 = arith.constant 0 : index
    %0 = vector.load %arg1[%c0, %c0_0] : memref<64x8xf32, #tpu.memory_space<vmem>>, vector<64x8xf32>
    %c0_1 = arith.constant 0 : index
    %c0_2 = arith.constant 0 : index
    %1 = vector.load %arg2[%c0_1, %c0_2] : memref<64x16xf32, #tpu.memory_space<vmem>>, vector<64x16xf32>
    %c0_3 = arith.constant 0 : index
    %c0_4 = arith.constant 0 : index
    %2 = vector.load %arg3[%c0_3, %c0_4] : memref<64x16xf32, #tpu.memory_space<vmem>>, vector<64x16xf32>
    %c0_5 = arith.constant 0 : index
    %c0_6 = arith.constant 0 : index
    %3 = vector.load %arg4[%c0_5, %c0_6] : memref<1x64xi32, #tpu.memory_space<vmem>>, vector<1x64xi32>
    %c0_i32 = arith.constant 0 : i32
    %4 = arith.cmpi eq, %arg0, %c0_i32 : i32
    %5 = arith.extui %4 : i1 to i32
    %c0_i32_7 = arith.constant 0 : i32
    %6 = arith.cmpi ne, %5, %c0_i32_7 : i32
    scf.if %6 {
      %cst_65 = arith.constant 0.000000e+00 : f32
      %110 = vector.broadcast %cst_65 : f32 to vector<16x16xf32>
      %c0_66 = arith.constant 0 : index
      %c0_67 = arith.constant 0 : index
      %111 = vector.load %arg20[%c0_66, %c0_67] : memref<16x16xf32, #tpu.memory_space<vmem>>, vector<16x16xf32>
      tpu.vector_store %arg20[%c0_66, %c0_67], %110 {strides = array<i32>} : memref<16x16xf32, #tpu.memory_space<vmem>>, vector<16x16xf32>,
    } else {
    }
    %c0_8 = arith.constant 0 : index
    %c0_9 = arith.constant 0 : index
    %7 = vector.load %arg5[%c0_8, %c0_9] : memref<8x32xf32, #tpu.memory_space<vmem>>, vector<8x32xf32>
    %cst = arith.constant dense<0.000000e+00> : vector<64x32xf32>
    %8 = tpu.matmul %0, %7, %cst {dimension_numbers = #tpu.dot_dimension_numbers<[1], [0], [0], [1], [0, 0, 1, 1], [], []>} : vector<64x8xf32>, vector<8x32xf32>, vector<64x32xf32> -> vector<64x32xf32>
    %c0_10 = arith.constant 0 : index
    %c0_11 = arith.constant 0 : index
    %9 = vector.load %arg6[%c0_10, %c0_11] : memref<1x32xf32, #tpu.memory_space<vmem>>, vector<1x32xf32>
    %10 = vector.broadcast %9 : vector<1x32xf32> to vector<64x32xf32>
    %11 = arith.addf %8, %10 : vector<64x32xf32>
    %cst_12 = arith.constant 0.000000e+00 : f32
    %12 = vector.broadcast %cst_12 : f32 to vector<64x32xf32>
    %13 = arith.maximumf %11, %12 : vector<64x32xf32>
    %c0_13 = arith.constant 0 : index
    %c0_14 = arith.constant 0 : index
    %14 = vector.load %arg7[%c0_13, %c0_14] : memref<32x16xf32, #tpu.memory_space<vmem>>, vector<32x16xf32>
    %c0_15 = arith.constant 0 : index
    %c0_16 = arith.constant 0 : index
    %15 = vector.load %arg8[%c0_15, %c0_16] : memref<1x16xf32, #tpu.memory_space<vmem>>, vector<1x16xf32>
    %cst_17 = arith.constant dense<0.000000e+00> : vector<64x16xf32>
    %16 = tpu.matmul %13, %14, %cst_17 {dimension_numbers = #tpu.dot_dimension_numbers<[1], [0], [0], [1], [0, 0, 1, 1], [], []>} : vector<64x32xf32>, vector<32x16xf32>, vector<64x16xf32> -> vector<64x16xf32>
    %17 = vector.broadcast %15 : vector<1x16xf32> to vector<64x16xf32>
    %18 = arith.addf %16, %17 : vector<64x16xf32>
    %c0_18 = arith.constant 0 : index
    %c0_19 = arith.constant 0 : index
    %19 = vector.load %arg9[%c0_18, %c0_19] : memref<1x16xf32, #tpu.memory_space<vmem>>, vector<1x16xf32>
    %c0_20 = arith.constant 0 : index
    %c0_21 = arith.constant 0 : index
    %20 = vector.load %arg10[%c0_20, %c0_21] : memref<1x16xf32, #tpu.memory_space<vmem>>, vector<1x16xf32>
    %cst_22 = arith.constant dense<0.000000e+00> : vector<64xf32>
    %21 = vector.multi_reduction <add>, %18, %cst_22 [1] : vector<64x16xf32> to vector<64xf32>
    %22 = vector.shape_cast %21 : vector<64xf32> to vector<64x1xf32>
    %cst_23 = arith.constant 1.600000e+01 : f32
    %23 = vector.broadcast %cst_23 : f32 to vector<64x1xf32>
    %24 = arith.divf %22, %23 : vector<64x1xf32>
    %25 = vector.broadcast %24 : vector<64x1xf32> to vector<64x16xf32>
    %26 = arith.subf %18, %25 : vector<64x16xf32>
    %27 = arith.mulf %26, %26 : vector<64x16xf32>
    %cst_24 = arith.constant dense<0.000000e+00> : vector<64xf32>
    %28 = vector.multi_reduction <add>, %27, %cst_24 [1] : vector<64x16xf32> to vector<64xf32>
    %29 = vector.shape_cast %28 : vector<64xf32> to vector<64x1xf32>
    %cst_25 = arith.constant 1.600000e+01 : f32
    %30 = vector.broadcast %cst_25 : f32 to vector<64x1xf32>
    %31 = arith.divf %29, %30 : vector<64x1xf32>
    %cst_26 = arith.constant 9.99999974E-6 : f32
    %32 = vector.broadcast %cst_26 : f32 to vector<64x1xf32>
    %33 = arith.addf %31, %32 : vector<64x1xf32>
    %34 = math.rsqrt %33 : vector<64x1xf32>
    %35 = vector.broadcast %34 : vector<64x1xf32> to vector<64x16xf32>
    %36 = arith.mulf %26, %35 : vector<64x16xf32>
    %37 = vector.broadcast %19 : vector<1x16xf32> to vector<64x16xf32>
    %38 = arith.mulf %36, %37 : vector<64x16xf32>
    %39 = vector.broadcast %20 : vector<1x16xf32> to vector<64x16xf32>
    %40 = arith.addf %38, %39 : vector<64x16xf32>
    %c0_27 = arith.constant 0 : index
    %c0_28 = arith.constant 0 : index
    %41 = vector.load %arg11[%c0_27, %c0_28] : memref<16x32xf32, #tpu.memory_space<vmem>>, vector<16x32xf32>
    %cst_29 = arith.constant dense<0.000000e+00> : vector<64x32xf32>
    %42 = tpu.matmul %1, %41, %cst_29 {dimension_numbers = #tpu.dot_dimension_numbers<[1], [0], [0], [1], [0, 0, 1, 1], [], []>} : vector<64x16xf32>, vector<16x32xf32>, vector<64x32xf32> -> vector<64x32xf32>
    %c0_30 = arith.constant 0 : index
    %c0_31 = arith.constant 0 : index
    %43 = vector.load %arg12[%c0_30, %c0_31] : memref<16x32xf32, #tpu.memory_space<vmem>>, vector<16x32xf32>
    %cst_32 = arith.constant dense<0.000000e+00> : vector<64x32xf32>
    %44 = tpu.matmul %2, %43, %cst_32 {dimension_numbers = #tpu.dot_dimension_numbers<[1], [0], [0], [1], [0, 0, 1, 1], [], []>} : vector<64x16xf32>, vector<16x32xf32>, vector<64x32xf32> -> vector<64x32xf32>
    %45 = arith.addf %42, %44 : vector<64x32xf32>
    %c0_33 = arith.constant 0 : index
    %c0_34 = arith.constant 0 : index
    %46 = vector.load %arg13[%c0_33, %c0_34] : memref<16x32xf32, #tpu.memory_space<vmem>>, vector<16x32xf32>
    %cst_35 = arith.constant dense<0.000000e+00> : vector<64x32xf32>
    %47 = tpu.matmul %40, %46, %cst_35 {dimension_numbers = #tpu.dot_dimension_numbers<[1], [0], [0], [1], [0, 0, 1, 1], [], []>} : vector<64x16xf32>, vector<16x32xf32>, vector<64x32xf32> -> vector<64x32xf32>
    %48 = arith.addf %45, %47 : vector<64x32xf32>
    %c0_36 = arith.constant 0 : index
    %c0_37 = arith.constant 0 : index
    %49 = vector.load %arg14[%c0_36, %c0_37] : memref<1x32xf32, #tpu.memory_space<vmem>>, vector<1x32xf32>
    %50 = vector.broadcast %49 : vector<1x32xf32> to vector<64x32xf32>
    %51 = arith.addf %48, %50 : vector<64x32xf32>
    %cst_38 = arith.constant 0.000000e+00 : f32
    %52 = vector.broadcast %cst_38 : f32 to vector<64x32xf32>
    %53 = arith.maximumf %51, %52 : vector<64x32xf32>
    %c0_39 = arith.constant 0 : index
    %c0_40 = arith.constant 0 : index
    %54 = vector.load %arg15[%c0_39, %c0_40] : memref<32x16xf32, #tpu.memory_space<vmem>>, vector<32x16xf32>
    %c0_41 = arith.constant 0 : index
    %c0_42 = arith.constant 0 : index
    %55 = vector.load %arg16[%c0_41, %c0_42] : memref<1x16xf32, #tpu.memory_space<vmem>>, vector<1x16xf32>
    %cst_43 = arith.constant dense<0.000000e+00> : vector<64x16xf32>
    %56 = tpu.matmul %53, %54, %cst_43 {dimension_numbers = #tpu.dot_dimension_numbers<[1], [0], [0], [1], [0, 0, 1, 1], [], []>} : vector<64x32xf32>, vector<32x16xf32>, vector<64x16xf32> -> vector<64x16xf32>
    %57 = vector.broadcast %55 : vector<1x16xf32> to vector<64x16xf32>
    %58 = arith.addf %56, %57 : vector<64x16xf32>
    %c0_44 = arith.constant 0 : index
    %c0_45 = arith.constant 0 : index
    %59 = vector.load %arg17[%c0_44, %c0_45] : memref<1x16xf32, #tpu.memory_space<vmem>>, vector<1x16xf32>
    %c0_46 = arith.constant 0 : index
    %c0_47 = arith.constant 0 : index
    %60 = vector.load %arg18[%c0_46, %c0_47] : memref<1x16xf32, #tpu.memory_space<vmem>>, vector<1x16xf32>
    %cst_48 = arith.constant dense<0.000000e+00> : vector<64xf32>
    %61 = vector.multi_reduction <add>, %58, %cst_48 [1] : vector<64x16xf32> to vector<64xf32>
    %62 = vector.shape_cast %61 : vector<64xf32> to vector<64x1xf32>
    %cst_49 = arith.constant 1.600000e+01 : f32
    %63 = vector.broadcast %cst_49 : f32 to vector<64x1xf32>
    %64 = arith.divf %62, %63 : vector<64x1xf32>
    %65 = vector.broadcast %64 : vector<64x1xf32> to vector<64x16xf32>
    %66 = arith.subf %58, %65 : vector<64x16xf32>
    %67 = arith.mulf %66, %66 : vector<64x16xf32>
    %cst_50 = arith.constant dense<0.000000e+00> : vector<64xf32>
    %68 = vector.multi_reduction <add>, %67, %cst_50 [1] : vector<64x16xf32> to vector<64xf32>
    %69 = vector.shape_cast %68 : vector<64xf32> to vector<64x1xf32>
    %cst_51 = arith.constant 1.600000e+01 : f32
    %70 = vector.broadcast %cst_51 : f32 to vector<64x1xf32>
    %71 = arith.divf %69, %70 : vector<64x1xf32>
    %cst_52 = arith.constant 9.99999974E-6 : f32
    %72 = vector.broadcast %cst_52 : f32 to vector<64x1xf32>
    %73 = arith.addf %71, %72 : vector<64x1xf32>
    %74 = math.rsqrt %73 : vector<64x1xf32>
    %75 = vector.broadcast %74 : vector<64x1xf32> to vector<64x16xf32>
    %76 = arith.mulf %66, %75 : vector<64x16xf32>
    %77 = vector.broadcast %59 : vector<1x16xf32> to vector<64x16xf32>
    %78 = arith.mulf %76, %77 : vector<64x16xf32>
    %79 = vector.broadcast %60 : vector<1x16xf32> to vector<64x16xf32>
    %80 = arith.addf %78, %79 : vector<64x16xf32>
    %c64_i32 = arith.constant 64 : i32
    %81 = arith.muli %arg0, %c64_i32 : i32
    %82 = tpu.iota {dimensions = array<i32: 0>} : vector<64x1xi32>
    %83 = vector.broadcast %81 : i32 to vector<64x1xi32>
    %84 = arith.addi %83, %82 : vector<64x1xi32>
    %c64_i32_53 = arith.constant 64 : i32
    %85 = vector.broadcast %c64_i32_53 : i32 to vector<64x1xi32>
    %86 = arith.cmpi slt, %84, %85 : vector<64x1xi32>
    %cst_54 = arith.constant 0.000000e+00 : f32
    %87 = vector.shape_cast %86 : vector<64x1xi1> to vector<64x1xi1>
    %88 = vector.broadcast %87 : vector<64x1xi1> to vector<64x16xi1>
    %89 = vector.broadcast %cst_54 : f32 to vector<64x16xf32>
    %90 = arith.select %88, %80, %89 : vector<64x16xi1>, vector<64x16xf32>
    %91 = tpu.iota {dimensions = array<i32: 0>} : vector<16x64xi32>
    %92 = tpu.iota {dimensions = array<i32: 1>} : vector<16x64xi32>
    %93 = vector.broadcast %3 : vector<1x64xi32> to vector<16x64xi32>
    %94 = arith.cmpi eq, %91, %93 : vector<16x64xi32>
    %95 = vector.broadcast %81 : i32 to vector<16x64xi32>
    %96 = arith.addi %95, %92 : vector<16x64xi32>
    %c64_i32_55 = arith.constant 64 : i32
    %97 = vector.broadcast %c64_i32_55 : i32 to vector<16x64xi32>
    %98 = arith.cmpi slt, %96, %97 : vector<16x64xi32>
    %99 = arith.andi %94, %98 : vector<16x64xi1>
    %cst_56 = arith.constant 1.000000e+00 : f32
    %cst_57 = arith.constant 0.000000e+00 : f32
    %100 = vector.broadcast %cst_56 : f32 to vector<16x64xf32>
    %101 = vector.broadcast %cst_57 : f32 to vector<16x64xf32>
    %102 = arith.select %99, %100, %101 : vector<16x64xi1>, vector<16x64xf32>
    %c0_58 = arith.constant 0 : index
    %c0_59 = arith.constant 0 : index
    %103 = vector.load %arg20[%c0_58, %c0_59] : memref<16x16xf32, #tpu.memory_space<vmem>>, vector<16x16xf32>
    %cst_60 = arith.constant dense<0.000000e+00> : vector<16x16xf32>
    %104 = tpu.matmul %102, %90, %cst_60 {dimension_numbers = #tpu.dot_dimension_numbers<[1], [0], [0], [1], [0, 0, 1, 1], [], []>} : vector<16x64xf32>, vector<64x16xf32>, vector<16x16xf32> -> vector<16x16xf32>
    %105 = arith.addf %103, %104 : vector<16x16xf32>
    %c0_61 = arith.constant 0 : index
    %c0_62 = arith.constant 0 : index
    %106 = vector.load %arg20[%c0_61, %c0_62] : memref<16x16xf32, #tpu.memory_space<vmem>>, vector<16x16xf32>
    tpu.vector_store %arg20[%c0_61, %c0_62], %105 {strides = array<i32>} : memref<16x16xf32, #tpu.memory_space<vmem>>, vector<16x16xf32>,
    %c0_i32_63 = arith.constant 0 : i32
    %107 = arith.cmpi eq, %arg0, %c0_i32_63 : i32
    %108 = arith.extui %107 : i1 to i32
    %c0_i32_64 = arith.constant 0 : i32
    %109 = arith.cmpi ne, %108, %c0_i32_64 : i32
    scf.if %109 {
      %c0_65 = arith.constant 0 : index
      %c0_66 = arith.constant 0 : index
      %110 = vector.load %arg20[%c0_65, %c0_66] : memref<16x16xf32, #tpu.memory_space<vmem>>, vector<16x16xf32>
      %c0_67 = arith.constant 0 : index
      %c0_68 = arith.constant 0 : index
      %111 = vector.load %arg19[%c0_67, %c0_68] : memref<16x16xf32, #tpu.memory_space<vmem>>, vector<16x16xf32>
      tpu.vector_store %arg19[%c0_67, %c0_68], %110 {strides = array<i32>} : memref<16x16xf32, #tpu.memory_space<vmem>>, vector<16x16xf32>,
    } else {
    }
    return
  }
  func.func @transform_0(%arg0: i32) -> (i32, i32) {
    %c0_i32 = arith.constant 0 : i32
    %c0_i32_0 = arith.constant 0 : i32
    return %arg0, %c0_i32 : i32, i32
  }
  func.func @transform_1(%arg0: i32) -> (i32, i32) {
    %c0_i32 = arith.constant 0 : i32
    %c0_i32_0 = arith.constant 0 : i32
    return %arg0, %c0_i32 : i32, i32
  }
  func.func @transform_2(%arg0: i32) -> (i32, i32) {
    %c0_i32 = arith.constant 0 : i32
    %c0_i32_0 = arith.constant 0 : i32
    return %arg0, %c0_i32 : i32, i32
  }
  func.func @transform_3(%arg0: i32) -> (i32, i32) {
    %c0_i32 = arith.constant 0 : i32
    %c0_i32_0 = arith.constant 0 : i32
    return %c0_i32, %arg0 : i32, i32
  }
  func.func @transform_4(%arg0: i32) -> (i32, i32) {
    %c0_i32 = arith.constant 0 : i32
    %c0_i32_0 = arith.constant 0 : i32
    %c0_i32_1 = arith.constant 0 : i32
    return %c0_i32, %c0_i32_0 : i32, i32
  }
  func.func @transform_5(%arg0: i32) -> (i32, i32) {
    %c0_i32 = arith.constant 0 : i32
    %c0_i32_0 = arith.constant 0 : i32
    %c0_i32_1 = arith.constant 0 : i32
    return %c0_i32, %c0_i32_0 : i32, i32
  }
  func.func @transform_6(%arg0: i32) -> (i32, i32) {
    %c0_i32 = arith.constant 0 : i32
    %c0_i32_0 = arith.constant 0 : i32
    %c0_i32_1 = arith.constant 0 : i32
    return %c0_i32, %c0_i32_0 : i32, i32
  }
  func.func @transform_7(%arg0: i32) -> (i32, i32) {
    %c0_i32 = arith.constant 0 : i32
    %c0_i32_0 = arith.constant 0 : i32
    %c0_i32_1 = arith.constant 0 : i32
    return %c0_i32, %c0_i32_0 : i32, i32
  }
  func.func @transform_8(%arg0: i32) -> (i32, i32) {
    %c0_i32 = arith.constant 0 : i32
    %c0_i32_0 = arith.constant 0 : i32
    %c0_i32_1 = arith.constant 0 : i32
    return %c0_i32, %c0_i32_0 : i32, i32
  }
  func.func @transform_9(%arg0: i32) -> (i32, i32) {
    %c0_i32 = arith.constant 0 : i32
    %c0_i32_0 = arith.constant 0 : i32
    %c0_i32_1 = arith.constant 0 : i32
    return %c0_i32, %c0_i32_0 : i32, i32
  }
  func.func @transform_10(%arg0: i32) -> (i32, i32) {
    %c0_i32 = arith.constant 0 : i32
    %c0_i32_0 = arith.constant 0 : i32
    %c0_i32_1 = arith.constant 0 : i32
    return %c0_i32, %c0_i32_0 : i32, i32
  }
  func.func @transform_11(%arg0: i32) -> (i32, i32) {
    %c0_i32 = arith.constant 0 : i32
    %c0_i32_0 = arith.constant 0 : i32
    %c0_i32_1 = arith.constant 0 : i32
    return %c0_i32, %c0_i32_0 : i32, i32
  }
  func.func @transform_12(%arg0: i32) -> (i32, i32) {
    %c0_i32 = arith.constant 0 : i32
    %c0_i32_0 = arith.constant 0 : i32
    %c0_i32_1 = arith.constant 0 : i32
    return %c0_i32, %c0_i32_0 : i32, i32
  }
  func.func @transform_13(%arg0: i32) -> (i32, i32) {
    %c0_i32 = arith.constant 0 : i32
    %c0_i32_0 = arith.constant 0 : i32
    %c0_i32_1 = arith.constant 0 : i32
    return %c0_i32, %c0_i32_0 : i32, i32
  }
  func.func @transform_14(%arg0: i32) -> (i32, i32) {
    %c0_i32 = arith.constant 0 : i32
    %c0_i32_0 = arith.constant 0 : i32
    %c0_i32_1 = arith.constant 0 : i32
    return %c0_i32, %c0_i32_0 : i32, i32
  }
  func.func @transform_15(%arg0: i32) -> (i32, i32) {
    %c0_i32 = arith.constant 0 : i32
    %c0_i32_0 = arith.constant 0 : i32
    %c0_i32_1 = arith.constant 0 : i32
    return %c0_i32, %c0_i32_0 : i32, i32
  }
  func.func @transform_16(%arg0: i32) -> (i32, i32) {
    %c0_i32 = arith.constant 0 : i32
    %c0_i32_0 = arith.constant 0 : i32
    %c0_i32_1 = arith.constant 0 : i32
    return %c0_i32, %c0_i32_0 : i32, i32
  }
  func.func @transform_17(%arg0: i32) -> (i32, i32) {
    %c0_i32 = arith.constant 0 : i32
    %c0_i32_0 = arith.constant 0 : i32
    %c0_i32_1 = arith.constant 0 : i32
    return %c0_i32, %c0_i32_0 : i32, i32
  }
  func.func @transform_18(%arg0: i32) -> (i32, i32) {
    %c0_i32 = arith.constant 0 : i32
    %c0_i32_0 = arith.constant 0 : i32
    %c0_i32_1 = arith.constant 0 : i32
    return %c0_i32, %c0_i32_0 : i32, i32
  }
}

</mosaic_0001>

<llo_original>
// kernel: tpu_custom_call.1
$region0: #{tpu_custom_call.1}
  #allocation0 [shape = 'u32[]', space=smem, size = 0x4, offset = 0x4, fixed_abs, tag = 'smem constant byte address 0x4 - core index']
  #allocation1 [shape = 'u32[144,128]{1,0:T(1,128)}', space=vmem, size = 0x12000, scoped, tag = 'internal scratch']
  #allocation2 [shape = 'f32[16,16]{1,0:T(8,128)}', space=vmem, size = 0x2000, scoped, tag = 'scratch operand']
  %s0 = inlined_call_operand.vmem [shape: f32[64,8], index: 0, kind: input, shape index: {}]
  %s1 = inlined_call_operand.vmem [shape: f32[64,16], index: 1, kind: input, shape index: {}]
  %s2 = inlined_call_operand.vmem [shape: f32[64,16], index: 2, kind: input, shape index: {}]
  %s3 = inlined_call_operand.vmem [shape: s32[1,64], index: 3, kind: input, shape index: {}]
  %s4 = inlined_call_operand.vmem [shape: f32[8,32], index: 4, kind: input, shape index: {}]
  %s5 = inlined_call_operand.vmem [shape: f32[1,32], index: 5, kind: input, shape index: {}]
  %s6 = inlined_call_operand.vmem [shape: f32[32,16], index: 6, kind: input, shape index: {}]
  %s7 = inlined_call_operand.vmem [shape: f32[1,16], index: 7, kind: input, shape index: {}]
  %s8 = inlined_call_operand.vmem [shape: f32[1,16], index: 8, kind: input, shape index: {}]
  %s9 = inlined_call_operand.vmem [shape: f32[1,16], index: 9, kind: input, shape index: {}]
  %s10 = inlined_call_operand.vmem [shape: f32[16,32], index: 10, kind: input, shape index: {}]
  %s11 = inlined_call_operand.vmem [shape: f32[16,32], index: 11, kind: input, shape index: {}]
  %s12 = inlined_call_operand.vmem [shape: f32[16,32], index: 12, kind: input, shape index: {}]
  %s13 = inlined_call_operand.vmem [shape: f32[1,32], index: 13, kind: input, shape index: {}]
  %s14 = inlined_call_operand.vmem [shape: f32[32,16], index: 14, kind: input, shape index: {}]
  %s15 = inlined_call_operand.vmem [shape: f32[1,16], index: 15, kind: input, shape index: {}]
  %s16 = inlined_call_operand.vmem [shape: f32[1,16], index: 16, kind: input, shape index: {}]
  %s17 = inlined_call_operand.vmem [shape: f32[1,16], index: 17, kind: input, shape index: {}]
  %s18 = inlined_call_operand.hbm [shape: f32[16,16], index: 18, kind: output, shape index: {}]
  %s19 = sld [smem:[#allocation0]]
  $region90: #{tpu_custom_call.1} parent=0
    _
  %s21 = ssub.s32 1, %s19
  %s22 = scalar_select 0, %s21, %s19
  $region1: #{tpu_custom_call.1} parent=0
    #allocation3 [shape = 'u8[8192]{0}', space=vmem, size = 0x2000, scoped, tag = 'output window, operand 0, single buffered']
    #allocation4 [shape = 's32[1]{0}', space=sflag, size = 0x4, scoped, tag = 'scoped memory for tpu_custom_call.1']
    %23 = vsyncpa [#allocation4], 0
    // Predicated region
    $region2: #{tpu_custom_call.1} parent=1 // pred_check
      _
    $region3: #{tpu_custom_call.1} parent=1 // pred_check_branch
      %25 = sbr.rel (0) target = $region5
    $region4: #{tpu_custom_call.1} parent=1 // pred_region
      _
    $region5: #{tpu_custom_call.1} parent=1 // pred_fallthru
      _
    // Predicated region
    $region6: #{tpu_custom_call.1} parent=1 // pred_check
      _
    $region7: #{tpu_custom_call.1} parent=1 // pred_check_branch
      %27 = sbr.rel (0) target = $region9
    $region8: #{tpu_custom_call.1} parent=1 // pred_region
      _
    $region9: #{tpu_custom_call.1} parent=1 // pred_fallthru
      _
    // Predicated region
    $region10: #{tpu_custom_call.1} parent=1 // pred_check
      _
    $region11: #{tpu_custom_call.1} parent=1 // pred_check_branch
      %29 = sbr.rel (0) target = $region13
    $region12: #{tpu_custom_call.1} parent=1 // pred_region
      _
    $region13: #{tpu_custom_call.1} parent=1 // pred_fallthru
      _
    // Predicated region
    $region14: #{tpu_custom_call.1} parent=1 // pred_check
      _
    $region15: #{tpu_custom_call.1} parent=1 // pred_check_branch
      %31 = sbr.rel (0) target = $region17
    $region16: #{tpu_custom_call.1} parent=1 // pred_region
      _
    $region17: #{tpu_custom_call.1} parent=1 // pred_fallthru
      _
    // Predicated region
    $region18: #{tpu_custom_call.1} parent=1 // pred_check
      _
    $region19: #{tpu_custom_call.1} parent=1 // pred_check_branch
      %33 = sbr.rel (0) target = $region21
    $region20: #{tpu_custom_call.1} parent=1 // pred_region
      _
    $region21: #{tpu_custom_call.1} parent=1 // pred_fallthru
      _
    // Predicated region
    $region22: #{tpu_custom_call.1} parent=1 // pred_check
      _
    $region23: #{tpu_custom_call.1} parent=1 // pred_check_branch
      %35 = sbr.rel (0) target = $region25
    $region24: #{tpu_custom_call.1} parent=1 // pred_region
      _
    $region25: #{tpu_custom_call.1} parent=1 // pred_fallthru
      _
    // Predicated region
    $region26: #{tpu_custom_call.1} parent=1 // pred_check
      _
    $region27: #{tpu_custom_call.1} parent=1 // pred_check_branch
      %37 = sbr.rel (0) target = $region29
    $region28: #{tpu_custom_call.1} parent=1 // pred_region
      _
    $region29: #{tpu_custom_call.1} parent=1 // pred_fallthru
      _
    // Predicated region
    $region30: #{tpu_custom_call.1} parent=1 // pred_check
      _
    $region31: #{tpu_custom_call.1} parent=1 // pred_check_branch
      %39 = sbr.rel (0) target = $region33
    $region32: #{tpu_custom_call.1} parent=1 // pred_region
      _
    $region33: #{tpu_custom_call.1} parent=1 // pred_fallthru
      _
    // Predicated region
    $region34: #{tpu_custom_call.1} parent=1 // pred_check
      _
    $region35: #{tpu_custom_call.1} parent=1 // pred_check_branch
      %41 = sbr.rel (0) target = $region37
    $region36: #{tpu_custom_call.1} parent=1 // pred_region
      _
    $region37: #{tpu_custom_call.1} parent=1 // pred_fallthru
      _
    // Predicated region
    $region38: #{tpu_custom_call.1} parent=1 // pred_check
      _
    $region39: #{tpu_custom_call.1} parent=1 // pred_check_branch
      %43 = sbr.rel (0) target = $region41
    $region40: #{tpu_custom_call.1} parent=1 // pred_region
      _
    $region41: #{tpu_custom_call.1} parent=1 // pred_fallthru
      _
    // Predicated region
    $region42: #{tpu_custom_call.1} parent=1 // pred_check
      _
    $region43: #{tpu_custom_call.1} parent=1 // pred_check_branch
      %45 = sbr.rel (0) target = $region45
    $region44: #{tpu_custom_call.1} parent=1 // pred_region
      _
    $region45: #{tpu_custom_call.1} parent=1 // pred_fallthru
      _
    // Predicated region
    $region46: #{tpu_custom_call.1} parent=1 // pred_check
      _
    $region47: #{tpu_custom_call.1} parent=1 // pred_check_branch
      %47 = sbr.rel (0) target = $region49
    $region48: #{tpu_custom_call.1} parent=1 // pred_region
      _
    $region49: #{tpu_custom_call.1} parent=1 // pred_fallthru
      _
    // Predicated region
    $region50: #{tpu_custom_call.1} parent=1 // pred_check
      _
    $region51: #{tpu_custom_call.1} parent=1 // pred_check_branch
      %49 = sbr.rel (0) target = $region53
    $region52: #{tpu_custom_call.1} parent=1 // pred_region
      _
    $region53: #{tpu_custom_call.1} parent=1 // pred_fallthru
      _
    // Predicated region
    $region54: #{tpu_custom_call.1} parent=1 // pred_check
      _
    $region55: #{tpu_custom_call.1} parent=1 // pred_check_branch
      %51 = sbr.rel (0) target = $region57
    $region56: #{tpu_custom_call.1} parent=1 // pred_region
      _
    $region57: #{tpu_custom_call.1} parent=1 // pred_fallthru
      _
    // Predicated region
    $region58: #{tpu_custom_call.1} parent=1 // pred_check
      _
    $region59: #{tpu_custom_call.1} parent=1 // pred_check_branch
      %53 = sbr.rel (0) target = $region61
    $region60: #{tpu_custom_call.1} parent=1 // pred_region
      _
    $region61: #{tpu_custom_call.1} parent=1 // pred_fallthru
      _
    // Predicated region
    $region62: #{tpu_custom_call.1} parent=1 // pred_check
      _
    $region63: #{tpu_custom_call.1} parent=1 // pred_check_branch
      %55 = sbr.rel (0) target = $region65
    $region64: #{tpu_custom_call.1} parent=1 // pred_region
      _
    $region65: #{tpu_custom_call.1} parent=1 // pred_fallthru
      _
    // Predicated region
    $region66: #{tpu_custom_call.1} parent=1 // pred_check
      _
    $region67: #{tpu_custom_call.1} parent=1 // pred_check_branch
      %57 = sbr.rel (0) target = $region69
    $region68: #{tpu_custom_call.1} parent=1 // pred_region
      _
    $region69: #{tpu_custom_call.1} parent=1 // pred_fallthru
      _
    // Predicated region
    $region70: #{tpu_custom_call.1} parent=1 // pred_check
      _
    $region71: #{tpu_custom_call.1} parent=1 // pred_check_branch
      %59 = sbr.rel (0) target = $region73
    $region72: #{tpu_custom_call.1} parent=1 // pred_region
      _
    $region73: #{tpu_custom_call.1} parent=1 // pred_fallthru
      _
    %v60 = vld [vmem:[%s0] sm:$0xff]
    %v61 = vld [vmem:[%s0 + $0x8] sm:$0xff]
    %v62 = vld [vmem:[%s0 + $0x10] sm:$0xff]
    %v63 = vld [vmem:[%s0 + $0x18] sm:$0xff]
    %v64 = vld [vmem:[%s0 + $0x20] sm:$0xff]
    %v65 = vld [vmem:[%s0 + $0x28] sm:$0xff]
    %v66 = vld [vmem:[%s0 + $0x30] sm:$0xff]
    %v67 = vld [vmem:[%s0 + $0x38] sm:$0xff]
    %v68 = vld [vmem:[%s1] sm:$0xff]
    %v69 = vld [vmem:[%s1 + $0x8] sm:$0xff]
    %v70 = vld [vmem:[%s1 + $0x10] sm:$0xff]
    %v71 = vld [vmem:[%s1 + $0x18] sm:$0xff]
    %v72 = vld [vmem:[%s1 + $0x20] sm:$0xff]
    %v73 = vld [vmem:[%s1 + $0x28] sm:$0xff]
    %v74 = vld [vmem:[%s1 + $0x30] sm:$0xff]
    %v75 = vld [vmem:[%s1 + $0x38] sm:$0xff]
    %v76 = vld [vmem:[%s2] sm:$0xff]
    %v77 = vld [vmem:[%s2 + $0x8] sm:$0xff]
    %v78 = vld [vmem:[%s2 + $0x10] sm:$0xff]
    %v79 = vld [vmem:[%s2 + $0x18] sm:$0xff]
    %v80 = vld [vmem:[%s2 + $0x20] sm:$0xff]
    %v81 = vld [vmem:[%s2 + $0x28] sm:$0xff]
    %v82 = vld [vmem:[%s2 + $0x30] sm:$0xff]
    %v83 = vld [vmem:[%s2 + $0x38] sm:$0xff]
    %v84 = vld [vmem:[%s3] sm:$0x1]
    %p85 = scmp.eq.s32.totalorder 0, 0
    // Predicated region
    $region74: #{tpu_custom_call.1} parent=1 // pred_check
      %p86 = pneg %p85
    $region75: #{tpu_custom_call.1} parent=1 // pred_check_branch
      %88 = sbr.rel (%p86) target = $region77
    $region76: #{tpu_custom_call.1} parent=1 // pred_region
      %vm89 = vcmask 130048
      %90 = vst.msk [vmem:[#allocation2] sm:$0xff] %vm89, 0.0
      %91 = vst.msk [vmem:[#allocation2 + $0x8] sm:$0xff] %vm89, 0.0
    $region77: #{tpu_custom_call.1} parent=1 // pred_fallthru
      _
    %v92 = vld [vmem:[%s4] sm:$0xff]
    %v93 = vld [vmem:[%s5] sm:$0x1]
    %v95 = vlaneseq
    %v96 = vshrl.u32 %v95, 7
    %v97 = vsub.s32 0, %v96
    %v98 = vrot.slane %v93, %v97
    %vm100 = vcmask 64512
    %v102 = vsel %vm100, %v60, 0
    %v105 = vsel %vm100, %v61, 0
    %v108 = vsel %vm100, %v62, 0
    %v111 = vsel %vm100, %v63, 0
    %v114 = vsel %vm100, %v64, 0
    %v117 = vsel %vm100, %v65, 0
    %v120 = vsel %vm100, %v66, 0
    %v123 = vsel %vm100, %v67, 0
    %125 = vmatprep.subr.mxu0 0.0
    %126 = vmatpush1.msra.mxu0 %v92
    %127 = vmatprep.subr.mxu0 0.0
    %128 = vmatpush1.msra.mxu0 0.0
    %129 = vmatprep.subr.mxu0 0.0
    %130 = vmatpush1.msra.mxu0 0.0
    %131 = vmatprep.subr.mxu0 0.0
    %132 = vmatpush1.msra.mxu0 0.0
    %133 = vmatprep.subr.mxu0 0.0
    %134 = vmatpush1.msra.mxu0 0.0
    %135 = vmatprep.subr.mxu0 0.0
    %136 = vmatpush1.msra.mxu0 0.0
    %137 = vmatprep.subr.mxu0 0.0
    %138 = vmatpush1.msra.mxu0 0.0
    %139 = vmatprep.subr.mxu0 0.0
    %140 = vmatpush1.msra.mxu0 0.0
    %141 = vmatprep.subr.mxu0 0.0
    %142 = vmatpush1.msra.mxu0 0.0
    %143 = vmatprep.subr.mxu0 0.0
    %144 = vmatpush1.msra.mxu0 0.0
    %145 = vmatprep.subr.mxu0 0.0
    %146 = vmatpush1.msra.mxu0 0.0
    %147 = vmatprep.subr.mxu0 0.0
    %148 = vmatpush1.msra.mxu0 0.0
    %149 = vmatprep.subr.mxu0 0.0
    %150 = vmatpush1.msra.mxu0 0.0
    %151 = vmatprep.subr.mxu0 0.0
    %152 = vmatpush1.msra.mxu0 0.0
    %153 = vmatprep.subr.mxu0 0.0
    %154 = vmatpush1.msra.mxu0 0.0
    %155 = vmatprep.subr.mxu0 0.0
    %156 = vmatpush1.msra.mxu0 0.0
    %157 = vmatprep.subr.mxu0 0.0
    %158 = vmatpush1.msra.mxu0 0.0
    %159 = vmatprep.subr.mxu0 0.0
    %160 = vmatpush1.msra.mxu0 0.0
    %161 = vmatprep.subr.mxu0 0.0
    %162 = vmatpush1.msra.mxu0 0.0
    %163 = vmatprep.subr.mxu0 0.0
    %164 = vmatpush1.msra.mxu0 0.0
    %165 = vmatprep.subr.mxu0 0.0
    %166 = vmatpush1.msra.mxu0 0.0
    %167 = vmatprep.subr.mxu0 0.0
    %168 = vmatpush1.msra.mxu0 0.0
    %169 = vmatprep.subr.mxu0 0.0
    %170 = vmatpush1.msra.mxu0 0.0
    %171 = vmatprep.subr.mxu0 0.0
    %172 = vmatpush1.msra.mxu0 0.0
    %173 = vmatprep.subr.mxu0 0.0
    %174 = vmatpush1.msra.mxu0 0.0
    %175 = vmatprep.subr.mxu0 0.0
    %176 = vmatpush1.msra.mxu0 0.0
    %177 = vmatprep.subr.mxu0 0.0
    %178 = vmatpush1.msra.mxu0 0.0
    %179 = vmatprep.subr.mxu0 0.0
    %180 = vmatpush1.msra.mxu0 0.0
    %181 = vmatprep.subr.mxu0 0.0
    %182 = vmatpush1.msra.mxu0 0.0
    %183 = vmatprep.subr.mxu0 0.0
    %184 = vmatpush1.msra.mxu0 0.0
    %185 = vmatprep.subr.mxu0 0.0
    %186 = vmatpush1.msra.mxu0 0.0
    %187 = vmatprep.subr.mxu0 0.0
    %188 = vmatpush1.msra.mxu0 0.0
    %189 = vmatprep.mubr.f32.mxu0 0.0
    %190 = vmatmul.mubr.f32.gmra.mrb[0].mxu0 %v102
    %v191 = vpop.f32.mrb[0].mxu0
    %v192 = vadd.f32 %v98, %v191
    %v193 = vpop.f32.mrb[0].mxu0
    %194 = vmatprep.mubr.f32.mxu0 0.0
    %195 = vmatmul.mubr.f32.gmra.mrb[0].mxu0 %v105
    %v196 = vpop.f32.mrb[0].mxu0
    %v197 = vadd.f32 %v98, %v196
    %v198 = vpop.f32.mrb[0].mxu0
    %199 = vmatprep.mubr.f32.mxu0 0.0
    %200 = vmatmul.mubr.f32.gmra.mrb[0].mxu0 %v108
    %v201 = vpop.f32.mrb[0].mxu0
    %v202 = vadd.f32 %v98, %v201
    %v203 = vpop.f32.mrb[0].mxu0
    %204 = vmatprep.mubr.f32.mxu0 0.0
    %205 = vmatmul.mubr.f32.gmra.mrb[0].mxu0 %v111
    %v206 = vpop.f32.mrb[0].mxu0
    %v207 = vadd.f32 %v98, %v206
    %v208 = vpop.f32.mrb[0].mxu0
    %209 = vmatprep.mubr.f32.mxu0 0.0
    %210 = vmatmul.mubr.f32.gmra.mrb[0].mxu0 %v114
    %v211 = vpop.f32.mrb[0].mxu0
    %v212 = vadd.f32 %v98, %v211
    %v213 = vpop.f32.mrb[0].mxu0
    %214 = vmatprep.mubr.f32.mxu0 0.0
    %215 = vmatmul.mubr.f32.gmra.mrb[0].mxu0 %v117
    %v216 = vpop.f32.mrb[0].mxu0
    %v217 = vadd.f32 %v98, %v216
    %v218 = vpop.f32.mrb[0].mxu0
    %219 = vmatprep.mubr.f32.mxu0 0.0
    %220 = vmatmul.mubr.f32.gmra.mrb[0].mxu0 %v120
    %v221 = vpop.f32.mrb[0].mxu0
    %v222 = vadd.f32 %v98, %v221
    %v223 = vpop.f32.mrb[0].mxu0
    %224 = vmatprep.mubr.f32.mxu0 0.0
    %225 = vmatmul.mubr.f32.gmra.mrb[0].mxu0 %v123
    %v226 = vpop.f32.mrb[0].mxu0
    %v227 = vadd.f32 %v98, %v226
    %v228 = vpop.f32.mrb[0].mxu0
    %229 = vdwg.mxu0
    %v230 = vmax.f32 %v192, 0.0
    %v231 = vmax.f32 %v197, 0.0
    %v232 = vmax.f32 %v202, 0.0
    %v233 = vmax.f32 %v207, 0.0
    %v234 = vmax.f32 %v212, 0.0
    %v235 = vmax.f32 %v217, 0.0
    %v236 = vmax.f32 %v222, 0.0
    %v237 = vmax.f32 %v227, 0.0
    %v238 = vld [vmem:[%s6] sm:$0xff]
    %v239 = vld [vmem:[%s6 + $0x8] sm:$0xff]
    %v240 = vld [vmem:[%s6 + $0x10] sm:$0xff]
    %v241 = vld [vmem:[%s6 + $0x18] sm:$0xff]
    %v242 = vld [vmem:[%s7] sm:$0x1]
    %v244 = vlaneseq
    %v245 = vshrl.u32 %v244, 7
    %v246 = vsub.s32 0, %v245
    %v247 = vrot.slane %v242, %v246
    %vm249 = vcmask 261120
    %v251 = vsel %vm249, %v230, 0
    %v254 = vsel %vm249, %v231, 0
    %v257 = vsel %vm249, %v232, 0
    %v260 = vsel %vm249, %v233, 0
    %v263 = vsel %vm249, %v234, 0
    %v266 = vsel %vm249, %v235, 0
    %v269 = vsel %vm249, %v236, 0
    %v272 = vsel %vm249, %v237, 0
    %274 = vmatprep.subr.mxu0 0.0
    %275 = vmatpush1.msra.mxu0 %v238
    %276 = vmatprep.subr.mxu0 0.0
    %277 = vmatpush1.msra.mxu0 %v239
    %278 = vmatprep.subr.mxu0 0.0
    %279 = vmatpush1.msra.mxu0 %v240
    %280 = vmatprep.subr.mxu0 0.0
    %281 = vmatpush1.msra.mxu0 %v241
    %282 = vmatprep.subr.mxu0 0.0
    %283 = vmatpush1.msra.mxu0 0.0
    %284 = vmatprep.subr.mxu0 0.0
    %285 = vmatpush1.msra.mxu0 0.0
    %286 = vmatprep.subr.mxu0 0.0
    %287 = vmatpush1.msra.mxu0 0.0
    %288 = vmatprep.subr.mxu0 0.0
    %289 = vmatpush1.msra.mxu0 0.0
    %290 = vmatprep.subr.mxu0 0.0
    %291 = vmatpush1.msra.mxu0 0.0
    %292 = vmatprep.subr.mxu0 0.0
    %293 = vmatpush1.msra.mxu0 0.0
    %294 = vmatprep.subr.mxu0 0.0
    %295 = vmatpush1.msra.mxu0 0.0
    %296 = vmatprep.subr.mxu0 0.0
    %297 = vmatpush1.msra.mxu0 0.0
    %298 = vmatprep.subr.mxu0 0.0
    %299 = vmatpush1.msra.mxu0 0.0
    %300 = vmatprep.subr.mxu0 0.0
    %301 = vmatpush1.msra.mxu0 0.0
    %302 = vmatprep.subr.mxu0 0.0
    %303 = vmatpush1.msra.mxu0 0.0
    %304 = vmatprep.subr.mxu0 0.0
    %305 = vmatpush1.msra.mxu0 0.0
    %306 = vmatprep.subr.mxu0 0.0
    %307 = vmatpush1.msra.mxu0 0.0
    %308 = vmatprep.subr.mxu0 0.0
    %309 = vmatpush1.msra.mxu0 0.0
    %310 = vmatprep.subr.mxu0 0.0
    %311 = vmatpush1.msra.mxu0 0.0
    %312 = vmatprep.subr.mxu0 0.0
    %313 = vmatpush1.msra.mxu0 0.0
    %314 = vmatprep.subr.mxu0 0.0
    %315 = vmatpush1.msra.mxu0 0.0
    %316 = vmatprep.subr.mxu0 0.0
    %317 = vmatpush1.msra.mxu0 0.0
    %318 = vmatprep.subr.mxu0 0.0
    %319 = vmatpush1.msra.mxu0 0.0
    %320 = vmatprep.subr.mxu0 0.0
    %321 = vmatpush1.msra.mxu0 0.0
    %322 = vmatprep.subr.mxu0 0.0
    %323 = vmatpush1.msra.mxu0 0.0
    %324 = vmatprep.subr.mxu0 0.0
    %325 = vmatpush1.msra.mxu0 0.0
    %326 = vmatprep.subr.mxu0 0.0
    %327 = vmatpush1.msra.mxu0 0.0
    %328 = vmatprep.subr.mxu0 0.0
    %329 = vmatpush1.msra.mxu0 0.0
    %330 = vmatprep.subr.mxu0 0.0
    %331 = vmatpush1.msra.mxu0 0.0
    %332 = vmatprep.subr.mxu0 0.0
    %333 = vmatpush1.msra.mxu0 0.0
    %334 = vmatprep.subr.mxu0 0.0
    %335 = vmatpush1.msra.mxu0 0.0
    %336 = vmatprep.subr.mxu0 0.0
    %337 = vmatpush1.msra.mxu0 0.0
    %338 = vmatprep.mubr.f32.mxu0 0.0
    %339 = vmatmul.mubr.f32.gmra.mrb[0].mxu0 %v251
    %v340 = vpop.f32.mrb[0].mxu0
    %v341 = vadd.f32 %v247, %v340
    %v342 = vpop.f32.mrb[0].mxu0
    %343 = vmatprep.mubr.f32.mxu0 0.0
    %344 = vmatmul.mubr.f32.gmra.mrb[0].mxu0 %v254
    %v345 = vpop.f32.mrb[0].mxu0
    %v346 = vadd.f32 %v247, %v345
    %v347 = vpop.f32.mrb[0].mxu0
    %348 = vmatprep.mubr.f32.mxu0 0.0
    %349 = vmatmul.mubr.f32.gmra.mrb[0].mxu0 %v257
    %v350 = vpop.f32.mrb[0].mxu0
    %v351 = vadd.f32 %v247, %v350
    %v352 = vpop.f32.mrb[0].mxu0
    %353 = vmatprep.mubr.f32.mxu0 0.0
    %354 = vmatmul.mubr.f32.gmra.mrb[0].mxu0 %v260
    %v355 = vpop.f32.mrb[0].mxu0
    %v356 = vadd.f32 %v247, %v355
    %v357 = vpop.f32.mrb[0].mxu0
    %358 = vmatprep.mubr.f32.mxu0 0.0
    %359 = vmatmul.mubr.f32.gmra.mrb[0].mxu0 %v263
    %v360 = vpop.f32.mrb[0].mxu0
    %v361 = vadd.f32 %v247, %v360
    %v362 = vpop.f32.mrb[0].mxu0
    %363 = vmatprep.mubr.f32.mxu0 0.0
    %364 = vmatmul.mubr.f32.gmra.mrb[0].mxu0 %v266
    %v365 = vpop.f32.mrb[0].mxu0
    %v366 = vadd.f32 %v247, %v365
    %v367 = vpop.f32.mrb[0].mxu0
    %368 = vmatprep.mubr.f32.mxu0 0.0
    %369 = vmatmul.mubr.f32.gmra.mrb[0].mxu0 %v269
    %v370 = vpop.f32.mrb[0].mxu0
    %v371 = vadd.f32 %v247, %v370
    %v372 = vpop.f32.mrb[0].mxu0
    %373 = vmatprep.mubr.f32.mxu0 0.0
    %374 = vmatmul.mubr.f32.gmra.mrb[0].mxu0 %v272
    %v375 = vpop.f32.mrb[0].mxu0
    %v376 = vadd.f32 %v247, %v375
    %v377 = vpop.f32.mrb[0].mxu0
    %378 = vdwg.mxu0
    %v379 = vld [vmem:[%s8] sm:$0x1]
    %v380 = vld [vmem:[%s9] sm:$0x1]
    %vm381 = vcmask 130048
    %v382 = vsel %vm381, %v341, 0.0
    %383 = vadd.xlane.f32.xlu0 %v382
    %v384 = vpop.xlane.xlu0 %383
    %v385 = vsel %vm381, %v346, 0.0
    %386 = vadd.xlane.f32.xlu0 %v385
    %v387 = vpop.xlane.xlu0 %386
    %v388 = vsel %vm381, %v351, 0.0
    %389 = vadd.xlane.f32.xlu0 %v388
    %v390 = vpop.xlane.xlu0 %389
    %v391 = vsel %vm381, %v356, 0.0
    %392 = vadd.xlane.f32.xlu0 %v391
    %v393 = vpop.xlane.xlu0 %392
    %v394 = vsel %vm381, %v361, 0.0
    %395 = vadd.xlane.f32.xlu0 %v394
    %v396 = vpop.xlane.xlu0 %395
    %v397 = vsel %vm381, %v366, 0.0
    %398 = vadd.xlane.f32.xlu0 %v397
    %v399 = vpop.xlane.xlu0 %398
    %v400 = vsel %vm381, %v371, 0.0
    %401 = vadd.xlane.f32.xlu0 %v400
    %v402 = vpop.xlane.xlu0 %401
    %v403 = vsel %vm381, %v376, 0.0
    %404 = vadd.xlane.f32.xlu0 %v403
    %v405 = vpop.xlane.xlu0 %404
    %v406 = vrcp.pop 16.0
    %v407 = vmul.f32 %v384, %v406
    %v408 = vmul.f32 %v387, %v406
    %v409 = vmul.f32 %v390, %v406
    %v410 = vmul.f32 %v393, %v406
    %v411 = vmul.f32 %v396, %v406
    %v412 = vmul.f32 %v399, %v406
    %v413 = vmul.f32 %v402, %v406
    %v414 = vmul.f32 %v405, %v406
    %v415 = vsub.f32 %v341, %v407
    %v416 = vsub.f32 %v346, %v408
    %v417 = vsub.f32 %v351, %v409
    %v418 = vsub.f32 %v356, %v410
    %v419 = vsub.f32 %v361, %v411
    %v420 = vsub.f32 %v366, %v412
    %v421 = vsub.f32 %v371, %v413
    %v422 = vsub.f32 %v376, %v414
    %v423 = vmul.f32 %v415, %v415
    %v424 = vmul.f32 %v416, %v416
    %v425 = vmul.f32 %v417, %v417
    %v426 = vmul.f32 %v418, %v418
    %v427 = vmul.f32 %v419, %v419
    %v428 = vmul.f32 %v420, %v420
    %v429 = vmul.f32 %v421, %v421
    %v430 = vmul.f32 %v422, %v422
    %v431 = vsel %vm381, %v423, 0.0
    %432 = vadd.xlane.f32.xlu0 %v431
    %v433 = vpop.xlane.xlu0 %432
    %v434 = vsel %vm381, %v424, 0.0
    %435 = vadd.xlane.f32.xlu0 %v434
    %v436 = vpop.xlane.xlu0 %435
    %v437 = vsel %vm381, %v425, 0.0
    %438 = vadd.xlane.f32.xlu0 %v437
    %v439 = vpop.xlane.xlu0 %438
    %v440 = vsel %vm381, %v426, 0.0
    %441 = vadd.xlane.f32.xlu0 %v440
    %v442 = vpop.xlane.xlu0 %441
    %v443 = vsel %vm381, %v427, 0.0
    %444 = vadd.xlane.f32.xlu0 %v443
    %v445 = vpop.xlane.xlu0 %444
    %v446 = vsel %vm381, %v428, 0.0
    %447 = vadd.xlane.f32.xlu0 %v446
    %v448 = vpop.xlane.xlu0 %447
    %v449 = vsel %vm381, %v429, 0.0
    %450 = vadd.xlane.f32.xlu0 %v449
    %v451 = vpop.xlane.xlu0 %450
    %v452 = vsel %vm381, %v430, 0.0
    %453 = vadd.xlane.f32.xlu0 %v452
    %v454 = vpop.xlane.xlu0 %453
    %v455 = vmul.f32 %v433, %v406
    %v456 = vmul.f32 %v436, %v406
    %v457 = vmul.f32 %v439, %v406
    %v458 = vmul.f32 %v442, %v406
    %v459 = vmul.f32 %v445, %v406
    %v460 = vmul.f32 %v448, %v406
    %v461 = vmul.f32 %v451, %v406
    %v462 = vmul.f32 %v454, %v406
    %v463 = vadd.f32 %v455, 1e-05
    %v464 = vadd.f32 %v456, 1e-05
    %v465 = vadd.f32 %v457, 1e-05
    %v466 = vadd.f32 %v458, 1e-05
    %v467 = vadd.f32 %v459, 1e-05
    %v468 = vadd.f32 %v460, 1e-05
    %v469 = vadd.f32 %v461, 1e-05
    %v470 = vadd.f32 %v462, 1e-05
    %v471 = vrsqrt.pop %v463
    %v472 = vrsqrt.pop %v464
    %v473 = vrsqrt.pop %v465
    %v474 = vrsqrt.pop %v466
    %v475 = vrsqrt.pop %v467
    %v476 = vrsqrt.pop %v468
    %v477 = vrsqrt.pop %v469
    %v478 = vrsqrt.pop %v470
    %v479 = vmul.f32 %v415, %v471
    %v480 = vmul.f32 %v416, %v472
    %v481 = vmul.f32 %v417, %v473
    %v482 = vmul.f32 %v418, %v474
    %v483 = vmul.f32 %v419, %v475
    %v484 = vmul.f32 %v420, %v476
    %v485 = vmul.f32 %v421, %v477
    %v486 = vmul.f32 %v422, %v478
    %v488 = vlaneseq
    %v489 = vshrl.u32 %v488, 7
    %v490 = vsub.s32 0, %v489
    %v491 = vrot.slane %v379, %v490
    %v493 = vmul.f32 %v479, %v491
    %v494 = vmul.f32 %v480, %v491
    %v495 = vmul.f32 %v481, %v491
    %v496 = vmul.f32 %v482, %v491
    %v497 = vmul.f32 %v483, %v491
    %v498 = vmul.f32 %v484, %v491
    %v499 = vmul.f32 %v485, %v491
    %v500 = vmul.f32 %v486, %v491
    %v502 = vlaneseq
    %v503 = vshrl.u32 %v502, 7
    %v504 = vsub.s32 0, %v503
    %v505 = vrot.slane %v380, %v504
    %v507 = vadd.f32 %v493, %v505
    %v508 = vadd.f32 %v494, %v505
    %v509 = vadd.f32 %v495, %v505
    %v510 = vadd.f32 %v496, %v505
    %v511 = vadd.f32 %v497, %v505
    %v512 = vadd.f32 %v498, %v505
    %v513 = vadd.f32 %v499, %v505
    %v514 = vadd.f32 %v500, %v505
    %v515 = vld [vmem:[%s10] sm:$0xff]
    %v516 = vld [vmem:[%s10 + $0x8] sm:$0xff]
    %v517 = vld [vmem:[%s11] sm:$0xff]
    %v518 = vld [vmem:[%s11 + $0x8] sm:$0xff]
    %v520 = vsel %vm381, %v76, 0
    %v523 = vsel %vm381, %v77, 0
    %v526 = vsel %vm381, %v78, 0
    %v529 = vsel %vm381, %v79, 0
    %v532 = vsel %vm381, %v80, 0
    %v535 = vsel %vm381, %v81, 0
    %v538 = vsel %vm381, %v82, 0
    %v541 = vsel %vm381, %v83, 0
    %543 = vmatprep.subr.mxu0 0.0
    %544 = vmatpush1.msra.mxu0 %v517
    %545 = vmatprep.subr.mxu0 0.0
    %546 = vmatpush1.msra.mxu0 %v518
    %547 = vmatprep.subr.mxu0 0.0
    %548 = vmatpush1.msra.mxu0 0.0
    %549 = vmatprep.subr.mxu0 0.0
    %550 = vmatpush1.msra.mxu0 0.0
    %551 = vmatprep.subr.mxu0 0.0
    %552 = vmatpush1.msra.mxu0 0.0
    %553 = vmatprep.subr.mxu0 0.0
    %554 = vmatpush1.msra.mxu0 0.0
    %555 = vmatprep.subr.mxu0 0.0
    %556 = vmatpush1.msra.mxu0 0.0
    %557 = vmatprep.subr.mxu0 0.0
    %558 = vmatpush1.msra.mxu0 0.0
    %559 = vmatprep.subr.mxu0 0.0
    %560 = vmatpush1.msra.mxu0 0.0
    %561 = vmatprep.subr.mxu0 0.0
    %562 = vmatpush1.msra.mxu0 0.0
    %563 = vmatprep.subr.mxu0 0.0
    %564 = vmatpush1.msra.mxu0 0.0
    %565 = vmatprep.subr.mxu0 0.0
    %566 = vmatpush1.msra.mxu0 0.0
    %567 = vmatprep.subr.mxu0 0.0
    %568 = vmatpush1.msra.mxu0 0.0
    %569 = vmatprep.subr.mxu0 0.0
    %570 = vmatpush1.msra.mxu0 0.0
    %571 = vmatprep.subr.mxu0 0.0
    %572 = vmatpush1.msra.mxu0 0.0
    %573 = vmatprep.subr.mxu0 0.0
    %574 = vmatpush1.msra.mxu0 0.0
    %575 = vmatprep.subr.mxu0 0.0
    %576 = vmatpush1.msra.mxu0 0.0
    %577 = vmatprep.subr.mxu0 0.0
    %578 = vmatpush1.msra.mxu0 0.0
    %579 = vmatprep.subr.mxu0 0.0
    %580 = vmatpush1.msra.mxu0 0.0
    %581 = vmatprep.subr.mxu0 0.0
    %582 = vmatpush1.msra.mxu0 0.0
    %583 = vmatprep.subr.mxu0 0.0
    %584 = vmatpush1.msra.mxu0 0.0
    %585 = vmatprep.subr.mxu0 0.0
    %586 = vmatpush1.msra.mxu0 0.0
    %587 = vmatprep.subr.mxu0 0.0
    %588 = vmatpush1.msra.mxu0 0.0
    %589 = vmatprep.subr.mxu0 0.0
    %590 = vmatpush1.msra.mxu0 0.0
    %591 = vmatprep.subr.mxu0 0.0
    %592 = vmatpush1.msra.mxu0 0.0
    %593 = vmatprep.subr.mxu0 0.0
    %594 = vmatpush1.msra.mxu0 0.0
    %595 = vmatprep.subr.mxu0 0.0
    %596 = vmatpush1.msra.mxu0 0.0
    %597 = vmatprep.subr.mxu0 0.0
    %598 = vmatpush1.msra.mxu0 0.0
    %599 = vmatprep.subr.mxu0 0.0
    %600 = vmatpush1.msra.mxu0 0.0
    %601 = vmatprep.subr.mxu0 0.0
    %602 = vmatpush1.msra.mxu0 0.0
    %603 = vmatprep.subr.mxu0 0.0
    %604 = vmatpush1.msra.mxu0 0.0
    %605 = vmatprep.subr.mxu0 0.0
    %606 = vmatpush1.msra.mxu0 0.0
    %607 = vmatprep.mubr.f32.mxu0 0.0
    %608 = vmatmul.mubr.f32.gmra.mrb[0].mxu0 %v520
    %v609 = vpop.f32.mrb[0].mxu0
    %v610 = vadd.f32 0.0, %v609
    %v611 = vpop.f32.mrb[0].mxu0
    %612 = vmatprep.mubr.f32.mxu0 0.0
    %613 = vmatmul.mubr.f32.gmra.mrb[0].mxu0 %v523
    %v614 = vpop.f32.mrb[0].mxu0
    %v615 = vadd.f32 0.0, %v614
    %v616 = vpop.f32.mrb[0].mxu0
    %617 = vmatprep.mubr.f32.mxu0 0.0
    %618 = vmatmul.mubr.f32.gmra.mrb[0].mxu0 %v526
    %v619 = vpop.f32.mrb[0].mxu0
    %v620 = vadd.f32 0.0, %v619
    %v621 = vpop.f32.mrb[0].mxu0
    %622 = vmatprep.mubr.f32.mxu0 0.0
    %623 = vmatmul.mubr.f32.gmra.mrb[0].mxu0 %v529
    %v624 = vpop.f32.mrb[0].mxu0
    %v625 = vadd.f32 0.0, %v624
    %v626 = vpop.f32.mrb[0].mxu0
    %627 = vmatprep.mubr.f32.mxu0 0.0
    %628 = vmatmul.mubr.f32.gmra.mrb[0].mxu0 %v532
    %v629 = vpop.f32.mrb[0].mxu0
    %v630 = vadd.f32 0.0, %v629
    %v631 = vpop.f32.mrb[0].mxu0
    %632 = vmatprep.mubr.f32.mxu0 0.0
    %633 = vmatmul.mubr.f32.gmra.mrb[0].mxu0 %v535
    %v634 = vpop.f32.mrb[0].mxu0
    %v635 = vadd.f32 0.0, %v634
    %v636 = vpop.f32.mrb[0].mxu0
    %637 = vmatprep.mubr.f32.mxu0 0.0
    %638 = vmatmul.mubr.f32.gmra.mrb[0].mxu0 %v538
    %v639 = vpop.f32.mrb[0].mxu0
    %v640 = vadd.f32 0.0, %v639
    %v641 = vpop.f32.mrb[0].mxu0
    %642 = vmatprep.mubr.f32.mxu0 0.0
    %643 = vmatmul.mubr.f32.gmra.mrb[0].mxu0 %v541
    %v644 = vpop.f32.mrb[0].mxu0
    %v645 = vadd.f32 0.0, %v644
    %v646 = vpop.f32.mrb[0].mxu0
    %647 = vdwg.mxu0
    %v649 = vsel %vm381, %v68, 0
    %v652 = vsel %vm381, %v69, 0
    %v655 = vsel %vm381, %v70, 0
    %v658 = vsel %vm381, %v71, 0
    %v661 = vsel %vm381, %v72, 0
    %v664 = vsel %vm381, %v73, 0
    %v667 = vsel %vm381, %v74, 0
    %v670 = vsel %vm381, %v75, 0
    %672 = vmatprep.subr.mxu0 0.0
    %673 = vmatpush1.msra.mxu0 %v515
    %674 = vmatprep.subr.mxu0 0.0
    %675 = vmatpush1.msra.mxu0 %v516
    %676 = vmatprep.subr.mxu0 0.0
    %677 = vmatpush1.msra.mxu0 0.0
    %678 = vmatprep.subr.mxu0 0.0
    %679 = vmatpush1.msra.mxu0 0.0
    %680 = vmatprep.subr.mxu0 0.0
    %681 = vmatpush1.msra.mxu0 0.0
    %682 = vmatprep.subr.mxu0 0.0
    %683 = vmatpush1.msra.mxu0 0.0
    %684 = vmatprep.subr.mxu0 0.0
    %685 = vmatpush1.msra.mxu0 0.0
    %686 = vmatprep.subr.mxu0 0.0
    %687 = vmatpush1.msra.mxu0 0.0
    %688 = vmatprep.subr.mxu0 0.0
    %689 = vmatpush1.msra.mxu0 0.0
    %690 = vmatprep.subr.mxu0 0.0
    %691 = vmatpush1.msra.mxu0 0.0
    %692 = vmatprep.subr.mxu0 0.0
    %693 = vmatpush1.msra.mxu0 0.0
    %694 = vmatprep.subr.mxu0 0.0
    %695 = vmatpush1.msra.mxu0 0.0
    %696 = vmatprep.subr.mxu0 0.0
    %697 = vmatpush1.msra.mxu0 0.0
    %698 = vmatprep.subr.mxu0 0.0
    %699 = vmatpush1.msra.mxu0 0.0
    %700 = vmatprep.subr.mxu0 0.0
    %701 = vmatpush1.msra.mxu0 0.0
    %702 = vmatprep.subr.mxu0 0.0
    %703 = vmatpush1.msra.mxu0 0.0
    %704 = vmatprep.subr.mxu0 0.0
    %705 = vmatpush1.msra.mxu0 0.0
    %706 = vmatprep.subr.mxu0 0.0
    %707 = vmatpush1.msra.mxu0 0.0
    %708 = vmatprep.subr.mxu0 0.0
    %709 = vmatpush1.msra.mxu0 0.0
    %710 = vmatprep.subr.mxu0 0.0
    %711 = vmatpush1.msra.mxu0 0.0
    %712 = vmatprep.subr.mxu0 0.0
    %713 = vmatpush1.msra.mxu0 0.0
    %714 = vmatprep.subr.mxu0 0.0
    %715 = vmatpush1.msra.mxu0 0.0
    %716 = vmatprep.subr.mxu0 0.0
    %717 = vmatpush1.msra.mxu0 0.0
    %718 = vmatprep.subr.mxu0 0.0
    %719 = vmatpush1.msra.mxu0 0.0
    %720 = vmatprep.subr.mxu0 0.0
    %721 = vmatpush1.msra.mxu0 0.0
    %722 = vmatprep.subr.mxu0 0.0
    %723 = vmatpush1.msra.mxu0 0.0
    %724 = vmatprep.subr.mxu0 0.0
    %725 = vmatpush1.msra.mxu0 0.0
    %726 = vmatprep.subr.mxu0 0.0
    %727 = vmatpush1.msra.mxu0 0.0
    %728 = vmatprep.subr.mxu0 0.0
    %729 = vmatpush1.msra.mxu0 0.0
    %730 = vmatprep.subr.mxu0 0.0
    %731 = vmatpush1.msra.mxu0 0.0
    %732 = vmatprep.subr.mxu0 0.0
    %733 = vmatpush1.msra.mxu0 0.0
    %734 = vmatprep.subr.mxu0 0.0
    %735 = vmatpush1.msra.mxu0 0.0
    %736 = vmatprep.mubr.f32.mxu0 0.0
    %737 = vmatmul.mubr.f32.gmra.mrb[0].mxu0 %v649
    %v738 = vpop.f32.mrb[0].mxu0
    %v739 = vadd.f32 %v610, %v738
    %v740 = vpop.f32.mrb[0].mxu0
    %741 = vmatprep.mubr.f32.mxu0 0.0
    %742 = vmatmul.mubr.f32.gmra.mrb[0].mxu0 %v652
    %v743 = vpop.f32.mrb[0].mxu0
    %v744 = vadd.f32 %v615, %v743
    %v745 = vpop.f32.mrb[0].mxu0
    %746 = vmatprep.mubr.f32.mxu0 0.0
    %747 = vmatmul.mubr.f32.gmra.mrb[0].mxu0 %v655
    %v748 = vpop.f32.mrb[0].mxu0
    %v749 = vadd.f32 %v620, %v748
    %v750 = vpop.f32.mrb[0].mxu0
    %751 = vmatprep.mubr.f32.mxu0 0.0
    %752 = vmatmul.mubr.f32.gmra.mrb[0].mxu0 %v658
    %v753 = vpop.f32.mrb[0].mxu0
    %v754 = vadd.f32 %v625, %v753
    %v755 = vpop.f32.mrb[0].mxu0
    %756 = vmatprep.mubr.f32.mxu0 0.0
    %757 = vmatmul.mubr.f32.gmra.mrb[0].mxu0 %v661
    %v758 = vpop.f32.mrb[0].mxu0
    %v759 = vadd.f32 %v630, %v758
    %v760 = vpop.f32.mrb[0].mxu0
    %761 = vmatprep.mubr.f32.mxu0 0.0
    %762 = vmatmul.mubr.f32.gmra.mrb[0].mxu0 %v664
    %v763 = vpop.f32.mrb[0].mxu0
    %v764 = vadd.f32 %v635, %v763
    %v765 = vpop.f32.mrb[0].mxu0
    %766 = vmatprep.mubr.f32.mxu0 0.0
    %767 = vmatmul.mubr.f32.gmra.mrb[0].mxu0 %v667
    %v768 = vpop.f32.mrb[0].mxu0
    %v769 = vadd.f32 %v640, %v768
    %v770 = vpop.f32.mrb[0].mxu0
    %771 = vmatprep.mubr.f32.mxu0 0.0
    %772 = vmatmul.mubr.f32.gmra.mrb[0].mxu0 %v670
    %v773 = vpop.f32.mrb[0].mxu0
    %v774 = vadd.f32 %v645, %v773
    %v775 = vpop.f32.mrb[0].mxu0
    %776 = vdwg.mxu0
    %v777 = vld [vmem:[%s12] sm:$0xff]
    %v778 = vld [vmem:[%s12 + $0x8] sm:$0xff]
    %v780 = vsel %vm381, %v507, 0
    %v783 = vsel %vm381, %v508, 0
    %v786 = vsel %vm381, %v509, 0
    %v789 = vsel %vm381, %v510, 0
    %v792 = vsel %vm381, %v511, 0
    %v795 = vsel %vm381, %v512, 0
    %v798 = vsel %vm381, %v513, 0
    %v801 = vsel %vm381, %v514, 0
    %803 = vmatprep.subr.mxu0 0.0
    %804 = vmatpush1.msra.mxu0 %v777
    %805 = vmatprep.subr.mxu0 0.0
    %806 = vmatpush1.msra.mxu0 %v778
    %807 = vmatprep.subr.mxu0 0.0
    %808 = vmatpush1.msra.mxu0 0.0
    %809 = vmatprep.subr.mxu0 0.0
    %810 = vmatpush1.msra.mxu0 0.0
    %811 = vmatprep.subr.mxu0 0.0
    %812 = vmatpush1.msra.mxu0 0.0
    %813 = vmatprep.subr.mxu0 0.0
    %814 = vmatpush1.msra.mxu0 0.0
    %815 = vmatprep.subr.mxu0 0.0
    %816 = vmatpush1.msra.mxu0 0.0
    %817 = vmatprep.subr.mxu0 0.0
    %818 = vmatpush1.msra.mxu0 0.0
    %819 = vmatprep.subr.mxu0 0.0
    %820 = vmatpush1.msra.mxu0 0.0
    %821 = vmatprep.subr.mxu0 0.0
    %822 = vmatpush1.msra.mxu0 0.0
    %823 = vmatprep.subr.mxu0 0.0
    %824 = vmatpush1.msra.mxu0 0.0
    %825 = vmatprep.subr.mxu0 0.0
    %826 = vmatpush1.msra.mxu0 0.0
    %827 = vmatprep.subr.mxu0 0.0
    %828 = vmatpush1.msra.mxu0 0.0
    %829 = vmatprep.subr.mxu0 0.0
    %830 = vmatpush1.msra.mxu0 0.0
    %831 = vmatprep.subr.mxu0 0.0
    %832 = vmatpush1.msra.mxu0 0.0
    %833 = vmatprep.subr.mxu0 0.0
    %834 = vmatpush1.msra.mxu0 0.0
    %835 = vmatprep.subr.mxu0 0.0
    %836 = vmatpush1.msra.mxu0 0.0
    %837 = vmatprep.subr.mxu0 0.0
    %838 = vmatpush1.msra.mxu0 0.0
    %839 = vmatprep.subr.mxu0 0.0
    %840 = vmatpush1.msra.mxu0 0.0
    %841 = vmatprep.subr.mxu0 0.0
    %842 = vmatpush1.msra.mxu0 0.0
    %843 = vmatprep.subr.mxu0 0.0
    %844 = vmatpush1.msra.mxu0 0.0
    %845 = vmatprep.subr.mxu0 0.0
    %846 = vmatpush1.msra.mxu0 0.0
    %847 = vmatprep.subr.mxu0 0.0
    %848 = vmatpush1.msra.mxu0 0.0
    %849 = vmatprep.subr.mxu0 0.0
    %850 = vmatpush1.msra.mxu0 0.0
    %851 = vmatprep.subr.mxu0 0.0
    %852 = vmatpush1.msra.mxu0 0.0
    %853 = vmatprep.subr.mxu0 0.0
    %854 = vmatpush1.msra.mxu0 0.0
    %855 = vmatprep.subr.mxu0 0.0
    %856 = vmatpush1.msra.mxu0 0.0
    %857 = vmatprep.subr.mxu0 0.0
    %858 = vmatpush1.msra.mxu0 0.0
    %859 = vmatprep.subr.mxu0 0.0
    %860 = vmatpush1.msra.mxu0 0.0
    %861 = vmatprep.subr.mxu0 0.0
    %862 = vmatpush1.msra.mxu0 0.0
    %863 = vmatprep.subr.mxu0 0.0
    %864 = vmatpush1.msra.mxu0 0.0
    %865 = vmatprep.subr.mxu0 0.0
    %866 = vmatpush1.msra.mxu0 0.0
    %867 = vmatprep.mubr.f32.mxu0 0.0
    %868 = vmatmul.mubr.f32.gmra.mrb[0].mxu0 %v780
    %v869 = vpop.f32.mrb[0].mxu0
    %v870 = vadd.f32 0.0, %v869
    %v871 = vpop.f32.mrb[0].mxu0
    %872 = vmatprep.mubr.f32.mxu0 0.0
    %873 = vmatmul.mubr.f32.gmra.mrb[0].mxu0 %v783
    %v874 = vpop.f32.mrb[0].mxu0
    %v875 = vadd.f32 0.0, %v874
    %v876 = vpop.f32.mrb[0].mxu0
    %877 = vmatprep.mubr.f32.mxu0 0.0
    %878 = vmatmul.mubr.f32.gmra.mrb[0].mxu0 %v786
    %v879 = vpop.f32.mrb[0].mxu0
    %v880 = vadd.f32 0.0, %v879
    %v881 = vpop.f32.mrb[0].mxu0
    %882 = vmatprep.mubr.f32.mxu0 0.0
    %883 = vmatmul.mubr.f32.gmra.mrb[0].mxu0 %v789
    %v884 = vpop.f32.mrb[0].mxu0
    %v885 = vadd.f32 0.0, %v884
    %v886 = vpop.f32.mrb[0].mxu0
    %887 = vmatprep.mubr.f32.mxu0 0.0
    %888 = vmatmul.mubr.f32.gmra.mrb[0].mxu0 %v792
    %v889 = vpop.f32.mrb[0].mxu0
    %v890 = vadd.f32 0.0, %v889
    %v891 = vpop.f32.mrb[0].mxu0
    %892 = vmatprep.mubr.f32.mxu0 0.0
    %893 = vmatmul.mubr.f32.gmra.mrb[0].mxu0 %v795
    %v894 = vpop.f32.mrb[0].mxu0
    %v895 = vadd.f32 0.0, %v894
    %v896 = vpop.f32.mrb[0].mxu0
    %897 = vmatprep.mubr.f32.mxu0 0.0
    %898 = vmatmul.mubr.f32.gmra.mrb[0].mxu0 %v798
    %v899 = vpop.f32.mrb[0].mxu0
    %v900 = vadd.f32 0.0, %v899
    %v901 = vpop.f32.mrb[0].mxu0
    %902 = vmatprep.mubr.f32.mxu0 0.0
    %903 = vmatmul.mubr.f32.gmra.mrb[0].mxu0 %v801
    %v904 = vpop.f32.mrb[0].mxu0
    %v905 = vadd.f32 0.0, %v904
    %v906 = vpop.f32.mrb[0].mxu0
    %907 = vdwg.mxu0
    %v908 = vadd.f32 %v739, %v870
    %v909 = vadd.f32 %v744, %v875
    %v910 = vadd.f32 %v749, %v880
    %v911 = vadd.f32 %v754, %v885
    %v912 = vadd.f32 %v759, %v890
    %v913 = vadd.f32 %v764, %v895
    %v914 = vadd.f32 %v769, %v900
    %v915 = vadd.f32 %v774, %v905
    %v916 = vld [vmem:[%s13] sm:$0x1]
    %v918 = vlaneseq
    %v919 = vshrl.u32 %v918, 7
    %v920 = vsub.s32 0, %v919
    %v921 = vrot.slane %v916, %v920
    %v923 = vadd.f32 %v908, %v921
    %v924 = vadd.f32 %v909, %v921
    %v925 = vadd.f32 %v910, %v921
    %v926 = vadd.f32 %v911, %v921
    %v927 = vadd.f32 %v912, %v921
    %v928 = vadd.f32 %v913, %v921
    %v929 = vadd.f32 %v914, %v921
    %v930 = vadd.f32 %v915, %v921
    %v931 = vmax.f32 %v923, 0.0
    %v932 = vmax.f32 %v924, 0.0
    %v933 = vmax.f32 %v925, 0.0
    %v934 = vmax.f32 %v926, 0.0
    %v935 = vmax.f32 %v927, 0.0
    %v936 = vmax.f32 %v928, 0.0
    %v937 = vmax.f32 %v929, 0.0
    %v938 = vmax.f32 %v930, 0.0
    %v939 = vld [vmem:[%s14] sm:$0xff]
    %v940 = vld [vmem:[%s14 + $0x8] sm:$0xff]
    %v941 = vld [vmem:[%s14 + $0x10] sm:$0xff]
    %v942 = vld [vmem:[%s14 + $0x18] sm:$0xff]
    %v943 = vld [vmem:[%s15] sm:$0x1]
    %v945 = vlaneseq
    %v946 = vshrl.u32 %v945, 7
    %v947 = vsub.s32 0, %v946
    %v948 = vrot.slane %v943, %v947
    %v951 = vsel %vm249, %v931, 0
    %v954 = vsel %vm249, %v932, 0
    %v957 = vsel %vm249, %v933, 0
    %v960 = vsel %vm249, %v934, 0
    %v963 = vsel %vm249, %v935, 0
    %v966 = vsel %vm249, %v936, 0
    %v969 = vsel %vm249, %v937, 0
    %v972 = vsel %vm249, %v938, 0
    %974 = vmatprep.subr.mxu0 0.0
    %975 = vmatpush1.msra.mxu0 %v939
    %976 = vmatprep.subr.mxu0 0.0
    %977 = vmatpush1.msra.mxu0 %v940
    %978 = vmatprep.subr.mxu0 0.0
    %979 = vmatpush1.msra.mxu0 %v941
    %980 = vmatprep.subr.mxu0 0.0
    %981 = vmatpush1.msra.mxu0 %v942
    %982 = vmatprep.subr.mxu0 0.0
    %983 = vmatpush1.msra.mxu0 0.0
    %984 = vmatprep.subr.mxu0 0.0
    %985 = vmatpush1.msra.mxu0 0.0
    %986 = vmatprep.subr.mxu0 0.0
    %987 = vmatpush1.msra.mxu0 0.0
    %988 = vmatprep.subr.mxu0 0.0
    %989 = vmatpush1.msra.mxu0 0.0
    %990 = vmatprep.subr.mxu0 0.0
    %991 = vmatpush1.msra.mxu0 0.0
    %992 = vmatprep.subr.mxu0 0.0
    %993 = vmatpush1.msra.mxu0 0.0
    %994 = vmatprep.subr.mxu0 0.0
    %995 = vmatpush1.msra.mxu0 0.0
    %996 = vmatprep.subr.mxu0 0.0
    %997 = vmatpush1.msra.mxu0 0.0
    %998 = vmatprep.subr.mxu0 0.0
    %999 = vmatpush1.msra.mxu0 0.0
    %1000 = vmatprep.subr.mxu0 0.0
    %1001 = vmatpush1.msra.mxu0 0.0
    %1002 = vmatprep.subr.mxu0 0.0
    %1003 = vmatpush1.msra.mxu0 0.0
    %1004 = vmatprep.subr.mxu0 0.0
    %1005 = vmatpush1.msra.mxu0 0.0
    %1006 = vmatprep.subr.mxu0 0.0
    %1007 = vmatpush1.msra.mxu0 0.0
    %1008 = vmatprep.subr.mxu0 0.0
    %1009 = vmatpush1.msra.mxu0 0.0
    %1010 = vmatprep.subr.mxu0 0.0
    %1011 = vmatpush1.msra.mxu0 0.0
    %1012 = vmatprep.subr.mxu0 0.0
    %1013 = vmatpush1.msra.mxu0 0.0
    %1014 = vmatprep.subr.mxu0 0.0
    %1015 = vmatpush1.msra.mxu0 0.0
    %1016 = vmatprep.subr.mxu0 0.0
    %1017 = vmatpush1.msra.mxu0 0.0
    %1018 = vmatprep.subr.mxu0 0.0
    %1019 = vmatpush1.msra.mxu0 0.0
    %1020 = vmatprep.subr.mxu0 0.0
    %1021 = vmatpush1.msra.mxu0 0.0
    %1022 = vmatprep.subr.mxu0 0.0
    %1023 = vmatpush1.msra.mxu0 0.0
    %1024 = vmatprep.subr.mxu0 0.0
    %1025 = vmatpush1.msra.mxu0 0.0
    %1026 = vmatprep.subr.mxu0 0.0
    %1027 = vmatpush1.msra.mxu0 0.0
    %1028 = vmatprep.subr.mxu0 0.0
    %1029 = vmatpush1.msra.mxu0 0.0
    %1030 = vmatprep.subr.mxu0 0.0
    %1031 = vmatpush1.msra.mxu0 0.0
    %1032 = vmatprep.subr.mxu0 0.0
    %1033 = vmatpush1.msra.mxu0 0.0
    %1034 = vmatprep.subr.mxu0 0.0
    %1035 = vmatpush1.msra.mxu0 0.0
    %1036 = vmatprep.subr.mxu0 0.0
    %1037 = vmatpush1.msra.mxu0 0.0
    %1038 = vmatprep.mubr.f32.mxu0 0.0
    %1039 = vmatmul.mubr.f32.gmra.mrb[0].mxu0 %v951
    %v1040 = vpop.f32.mrb[0].mxu0
    %v1041 = vadd.f32 %v948, %v1040
    %v1042 = vpop.f32.mrb[0].mxu0
    %1043 = vmatprep.mubr.f32.mxu0 0.0
    %1044 = vmatmul.mubr.f32.gmra.mrb[0].mxu0 %v954
    %v1045 = vpop.f32.mrb[0].mxu0
    %v1046 = vadd.f32 %v948, %v1045
    %v1047 = vpop.f32.mrb[0].mxu0
    %1048 = vmatprep.mubr.f32.mxu0 0.0
    %1049 = vmatmul.mubr.f32.gmra.mrb[0].mxu0 %v957
    %v1050 = vpop.f32.mrb[0].mxu0
    %v1051 = vadd.f32 %v948, %v1050
    %v1052 = vpop.f32.mrb[0].mxu0
    %1053 = vmatprep.mubr.f32.mxu0 0.0
    %1054 = vmatmul.mubr.f32.gmra.mrb[0].mxu0 %v960
    %v1055 = vpop.f32.mrb[0].mxu0
    %v1056 = vadd.f32 %v948, %v1055
    %v1057 = vpop.f32.mrb[0].mxu0
    %1058 = vmatprep.mubr.f32.mxu0 0.0
    %1059 = vmatmul.mubr.f32.gmra.mrb[0].mxu0 %v963
    %v1060 = vpop.f32.mrb[0].mxu0
    %v1061 = vadd.f32 %v948, %v1060
    %v1062 = vpop.f32.mrb[0].mxu0
    %1063 = vmatprep.mubr.f32.mxu0 0.0
    %1064 = vmatmul.mubr.f32.gmra.mrb[0].mxu0 %v966
    %v1065 = vpop.f32.mrb[0].mxu0
    %v1066 = vadd.f32 %v948, %v1065
    %v1067 = vpop.f32.mrb[0].mxu0
    %1068 = vmatprep.mubr.f32.mxu0 0.0
    %1069 = vmatmul.mubr.f32.gmra.mrb[0].mxu0 %v969
    %v1070 = vpop.f32.mrb[0].mxu0
    %v1071 = vadd.f32 %v948, %v1070
    %v1072 = vpop.f32.mrb[0].mxu0
    %1073 = vmatprep.mubr.f32.mxu0 0.0
    %1074 = vmatmul.mubr.f32.gmra.mrb[0].mxu0 %v972
    %v1075 = vpop.f32.mrb[0].mxu0
    %v1076 = vadd.f32 %v948, %v1075
    %v1077 = vpop.f32.mrb[0].mxu0
    %1078 = vdwg.mxu0
    %v1079 = vld [vmem:[%s16] sm:$0x1]
    %v1080 = vld [vmem:[%s17] sm:$0x1]
    %v1081 = vsel %vm381, %v1041, 0.0
    %1082 = vadd.xlane.f32.xlu0 %v1081
    %v1083 = vpop.xlane.xlu0 %1082
    %v1084 = vsel %vm381, %v1046, 0.0
    %1085 = vadd.xlane.f32.xlu0 %v1084
    %v1086 = vpop.xlane.xlu0 %1085
    %v1087 = vsel %vm381, %v1051, 0.0
    %1088 = vadd.xlane.f32.xlu0 %v1087
    %v1089 = vpop.xlane.xlu0 %1088
    %v1090 = vsel %vm381, %v1056, 0.0
    %1091 = vadd.xlane.f32.xlu0 %v1090
    %v1092 = vpop.xlane.xlu0 %1091
    %v1093 = vsel %vm381, %v1061, 0.0
    %1094 = vadd.xlane.f32.xlu0 %v1093
    %v1095 = vpop.xlane.xlu0 %1094
    %v1096 = vsel %vm381, %v1066, 0.0
    %1097 = vadd.xlane.f32.xlu0 %v1096
    %v1098 = vpop.xlane.xlu0 %1097
    %v1099 = vsel %vm381, %v1071, 0.0
    %1100 = vadd.xlane.f32.xlu0 %v1099
    %v1101 = vpop.xlane.xlu0 %1100
    %v1102 = vsel %vm381, %v1076, 0.0
    %1103 = vadd.xlane.f32.xlu0 %v1102
    %v1104 = vpop.xlane.xlu0 %1103
    %v1105 = vmul.f32 %v1083, %v406
    %v1106 = vmul.f32 %v1086, %v406
    %v1107 = vmul.f32 %v1089, %v406
    %v1108 = vmul.f32 %v1092, %v406
    %v1109 = vmul.f32 %v1095, %v406
    %v1110 = vmul.f32 %v1098, %v406
    %v1111 = vmul.f32 %v1101, %v406
    %v1112 = vmul.f32 %v1104, %v406
    %v1113 = vsub.f32 %v1041, %v1105
    %v1114 = vsub.f32 %v1046, %v1106
    %v1115 = vsub.f32 %v1051, %v1107
    %v1116 = vsub.f32 %v1056, %v1108
    %v1117 = vsub.f32 %v1061, %v1109
    %v1118 = vsub.f32 %v1066, %v1110
    %v1119 = vsub.f32 %v1071, %v1111
    %v1120 = vsub.f32 %v1076, %v1112
    %v1121 = vmul.f32 %v1113, %v1113
    %v1122 = vmul.f32 %v1114, %v1114
    %v1123 = vmul.f32 %v1115, %v1115
    %v1124 = vmul.f32 %v1116, %v1116
    %v1125 = vmul.f32 %v1117, %v1117
    %v1126 = vmul.f32 %v1118, %v1118
    %v1127 = vmul.f32 %v1119, %v1119
    %v1128 = vmul.f32 %v1120, %v1120
    %v1129 = vsel %vm381, %v1121, 0.0
    %1130 = vadd.xlane.f32.xlu0 %v1129
    %v1131 = vpop.xlane.xlu0 %1130
    %v1132 = vsel %vm381, %v1122, 0.0
    %1133 = vadd.xlane.f32.xlu0 %v1132
    %v1134 = vpop.xlane.xlu0 %1133
    %v1135 = vsel %vm381, %v1123, 0.0
    %1136 = vadd.xlane.f32.xlu0 %v1135
    %v1137 = vpop.xlane.xlu0 %1136
    %v1138 = vsel %vm381, %v1124, 0.0
    %1139 = vadd.xlane.f32.xlu0 %v1138
    %v1140 = vpop.xlane.xlu0 %1139
    %v1141 = vsel %vm381, %v1125, 0.0
    %1142 = vadd.xlane.f32.xlu0 %v1141
    %v1143 = vpop.xlane.xlu0 %1142
    %v1144 = vsel %vm381, %v1126, 0.0
    %1145 = vadd.xlane.f32.xlu0 %v1144
    %v1146 = vpop.xlane.xlu0 %1145
    %v1147 = vsel %vm381, %v1127, 0.0
    %1148 = vadd.xlane.f32.xlu0 %v1147
    %v1149 = vpop.xlane.xlu0 %1148
    %v1150 = vsel %vm381, %v1128, 0.0
    %1151 = vadd.xlane.f32.xlu0 %v1150
    %v1152 = vpop.xlane.xlu0 %1151
    %v1153 = vmul.f32 %v1131, %v406
    %v1154 = vmul.f32 %v1134, %v406
    %v1155 = vmul.f32 %v1137, %v406
    %v1156 = vmul.f32 %v1140, %v406
    %v1157 = vmul.f32 %v1143, %v406
    %v1158 = vmul.f32 %v1146, %v406
    %v1159 = vmul.f32 %v1149, %v406
    %v1160 = vmul.f32 %v1152, %v406
    %v1161 = vadd.f32 %v1153, 1e-05
    %v1162 = vadd.f32 %v1154, 1e-05
    %v1163 = vadd.f32 %v1155, 1e-05
    %v1164 = vadd.f32 %v1156, 1e-05
    %v1165 = vadd.f32 %v1157, 1e-05
    %v1166 = vadd.f32 %v1158, 1e-05
    %v1167 = vadd.f32 %v1159, 1e-05
    %v1168 = vadd.f32 %v1160, 1e-05
    %v1169 = vrsqrt.pop %v1161
    %v1170 = vrsqrt.pop %v1162
    %v1171 = vrsqrt.pop %v1163
    %v1172 = vrsqrt.pop %v1164
    %v1173 = vrsqrt.pop %v1165
    %v1174 = vrsqrt.pop %v1166
    %v1175 = vrsqrt.pop %v1167
    %v1176 = vrsqrt.pop %v1168
    %v1177 = vmul.f32 %v1113, %v1169
    %v1178 = vmul.f32 %v1114, %v1170
    %v1179 = vmul.f32 %v1115, %v1171
    %v1180 = vmul.f32 %v1116, %v1172
    %v1181 = vmul.f32 %v1117, %v1173
    %v1182 = vmul.f32 %v1118, %v1174
    %v1183 = vmul.f32 %v1119, %v1175
    %v1184 = vmul.f32 %v1120, %v1176
    %v1186 = vlaneseq
    %v1187 = vshrl.u32 %v1186, 7
    %v1188 = vsub.s32 0, %v1187
    %v1189 = vrot.slane %v1079, %v1188
    %v1191 = vmul.f32 %v1177, %v1189
    %v1192 = vmul.f32 %v1178, %v1189
    %v1193 = vmul.f32 %v1179, %v1189
    %v1194 = vmul.f32 %v1180, %v1189
    %v1195 = vmul.f32 %v1181, %v1189
    %v1196 = vmul.f32 %v1182, %v1189
    %v1197 = vmul.f32 %v1183, %v1189
    %v1198 = vmul.f32 %v1184, %v1189
    %v1200 = vlaneseq
    %v1201 = vshrl.u32 %v1200, 7
    %v1202 = vsub.s32 0, %v1201
    %v1203 = vrot.slane %v1080, %v1202
    %v1205 = vadd.f32 %v1191, %v1203
    %v1206 = vadd.f32 %v1192, %v1203
    %v1207 = vadd.f32 %v1193, %v1203
    %v1208 = vadd.f32 %v1194, %v1203
    %v1209 = vadd.f32 %v1195, %v1203
    %v1210 = vadd.f32 %v1196, %v1203
    %v1211 = vadd.f32 %v1197, %v1203
    %v1212 = vadd.f32 %v1198, %v1203
    %s1213 = smul.u32 0, 64
    %v1214 = vlaneseq
    %v1215 = vshrl.u32 %v1214, 7
    %v1216 = vadd.s32 %v1215, 8
    %v1217 = vadd.s32 %v1215, 16
    %v1218 = vadd.s32 %v1215, 24
    %v1219 = vadd.s32 %v1215, 32
    %v1220 = vadd.s32 %v1215, 40
    %v1221 = vadd.s32 %v1215, 48
    %v1222 = vadd.s32 %v1215, 56
    %v1223 = vstv %s1213
    %v1224 = vadd.s32 %v1223, %v1215
    %v1225 = vadd.s32 %v1223, %v1216
    %v1226 = vadd.s32 %v1223, %v1217
    %v1227 = vadd.s32 %v1223, %v1218
    %v1228 = vadd.s32 %v1223, %v1219
    %v1229 = vadd.s32 %v1223, %v1220
    %v1230 = vadd.s32 %v1223, %v1221
    %v1231 = vadd.s32 %v1223, %v1222
    %vm1232 = vcmp.lt.s32.totalorder %v1224, 64
    %vm1233 = vcmp.lt.s32.totalorder %v1225, 64
    %vm1234 = vcmp.lt.s32.totalorder %v1226, 64
    %vm1235 = vcmp.lt.s32.totalorder %v1227, 64
    %vm1236 = vcmp.lt.s32.totalorder %v1228, 64
    %vm1237 = vcmp.lt.s32.totalorder %v1229, 64
    %vm1238 = vcmp.lt.s32.totalorder %v1230, 64
    %vm1239 = vcmp.lt.s32.totalorder %v1231, 64
    %v1240 = vsel %vm1232, 1, 0
    %v1241 = vsel %vm1233, 1, 0
    %v1242 = vsel %vm1234, 1, 0
    %v1243 = vsel %vm1235, 1, 0
    %v1244 = vsel %vm1236, 1, 0
    %v1245 = vsel %vm1237, 1, 0
    %v1246 = vsel %vm1238, 1, 0
    %v1247 = vsel %vm1239, 1, 0
    %vm1248 = vcmp.eq.s32.totalorder %v1240, 1
    %vm1249 = vcmp.eq.s32.totalorder %v1241, 1
    %vm1250 = vcmp.eq.s32.totalorder %v1242, 1
    %vm1251 = vcmp.eq.s32.totalorder %v1243, 1
    %vm1252 = vcmp.eq.s32.totalorder %v1244, 1
    %vm1253 = vcmp.eq.s32.totalorder %v1245, 1
    %vm1254 = vcmp.eq.s32.totalorder %v1246, 1
    %vm1255 = vcmp.eq.s32.totalorder %v1247, 1
    %v1256 = vsel %vm1248, %v1205, 0.0
    %v1257 = vsel %vm1249, %v1206, 0.0
    %v1258 = vsel %vm1250, %v1207, 0.0
    %v1259 = vsel %vm1251, %v1208, 0.0
    %v1260 = vsel %vm1252, %v1209, 0.0
    %v1261 = vsel %vm1253, %v1210, 0.0
    %v1262 = vsel %vm1254, %v1211, 0.0
    %v1263 = vsel %vm1255, %v1212, 0.0
    %v1264 = vlaneseq
    %v1265 = vand.u32 %v1264, 127
    %v1266 = vlaneseq
    %v1267 = vshrl.u32 %v1266, 7
    %v1268 = vsub.s32 0, %v1267
    %v1269 = vrot.slane %v84, %v1268
    %vm1270 = vcmp.eq.s32.totalorder %v1215, %v1269
    %vm1271 = vcmp.eq.s32.totalorder %v1216, %v1269
    %v1272 = vadd.s32 %v1223, %v1265
    %vm1273 = vcmp.lt.s32.totalorder %v1272, 64
    %vm1274 = vmand %vm1270, %vm1273
    %vm1275 = vmand %vm1271, %vm1273
    %v1276 = vsel %vm1274, 1.0, 0.0
    %v1277 = vsel %vm1275, 1.0, 0.0
    %v1278 = vld [vmem:[#allocation2] sm:$0xff]
    %v1279 = vld [vmem:[#allocation2 + $0x8] sm:$0xff]
    %vm1280 = vcmask 523264
    %v1282 = vsel %vm1280, %v1276, 0
    %v1285 = vsel %vm1280, %v1277, 0
    %1287 = vmatprep.subr.mxu0 0.0
    %1288 = vmatpush1.msra.mxu0 %v1256
    %1289 = vmatprep.subr.mxu0 0.0
    %1290 = vmatpush1.msra.mxu0 %v1257
    %1291 = vmatprep.subr.mxu0 0.0
    %1292 = vmatpush1.msra.mxu0 %v1258
    %1293 = vmatprep.subr.mxu0 0.0
    %1294 = vmatpush1.msra.mxu0 %v1259
    %1295 = vmatprep.subr.mxu0 0.0
    %1296 = vmatpush1.msra.mxu0 %v1260
    %1297 = vmatprep.subr.mxu0 0.0
    %1298 = vmatpush1.msra.mxu0 %v1261
    %1299 = vmatprep.subr.mxu0 0.0
    %1300 = vmatpush1.msra.mxu0 %v1262
    %1301 = vmatprep.subr.mxu0 0.0
    %1302 = vmatpush1.msra.mxu0 %v1263
    %1303 = vmatprep.subr.mxu0 0.0
    %1304 = vmatpush1.msra.mxu0 0.0
    %1305 = vmatprep.subr.mxu0 0.0
    %1306 = vmatpush1.msra.mxu0 0.0
    %1307 = vmatprep.subr.mxu0 0.0
    %1308 = vmatpush1.msra.mxu0 0.0
    %1309 = vmatprep.subr.mxu0 0.0
    %1310 = vmatpush1.msra.mxu0 0.0
    %1311 = vmatprep.subr.mxu0 0.0
    %1312 = vmatpush1.msra.mxu0 0.0
    %1313 = vmatprep.subr.mxu0 0.0
    %1314 = vmatpush1.msra.mxu0 0.0
    %1315 = vmatprep.subr.mxu0 0.0
    %1316 = vmatpush1.msra.mxu0 0.0
    %1317 = vmatprep.subr.mxu0 0.0
    %1318 = vmatpush1.msra.mxu0 0.0
    %1319 = vmatprep.subr.mxu0 0.0
    %1320 = vmatpush1.msra.mxu0 0.0
    %1321 = vmatprep.subr.mxu0 0.0
    %1322 = vmatpush1.msra.mxu0 0.0
    %1323 = vmatprep.subr.mxu0 0.0
    %1324 = vmatpush1.msra.mxu0 0.0
    %1325 = vmatprep.subr.mxu0 0.0
    %1326 = vmatpush1.msra.mxu0 0.0
    %1327 = vmatprep.subr.mxu0 0.0
    %1328 = vmatpush1.msra.mxu0 0.0
    %1329 = vmatprep.subr.mxu0 0.0
    %1330 = vmatpush1.msra.mxu0 0.0
    %1331 = vmatprep.subr.mxu0 0.0
    %1332 = vmatpush1.msra.mxu0 0.0
    %1333 = vmatprep.subr.mxu0 0.0
    %1334 = vmatpush1.msra.mxu0 0.0
    %1335 = vmatprep.subr.mxu0 0.0
    %1336 = vmatpush1.msra.mxu0 0.0
    %1337 = vmatprep.subr.mxu0 0.0
    %1338 = vmatpush1.msra.mxu0 0.0
    %1339 = vmatprep.subr.mxu0 0.0
    %1340 = vmatpush1.msra.mxu0 0.0
    %1341 = vmatprep.subr.mxu0 0.0
    %1342 = vmatpush1.msra.mxu0 0.0
    %1343 = vmatprep.subr.mxu0 0.0
    %1344 = vmatpush1.msra.mxu0 0.0
    %1345 = vmatprep.subr.mxu0 0.0
    %1346 = vmatpush1.msra.mxu0 0.0
    %1347 = vmatprep.subr.mxu0 0.0
    %1348 = vmatpush1.msra.mxu0 0.0
    %1349 = vmatprep.subr.mxu0 0.0
    %1350 = vmatpush1.msra.mxu0 0.0
    %1351 = vmatprep.mubr.f32.mxu0 0.0
    %1352 = vmatmul.mubr.f32.gmra.mrb[0].mxu0 %v1282
    %v1353 = vpop.f32.mrb[0].mxu0
    %v1354 = vadd.f32 0.0, %v1353
    %v1355 = vpop.f32.mrb[0].mxu0
    %1356 = vmatprep.mubr.f32.mxu0 0.0
    %1357 = vmatmul.mubr.f32.gmra.mrb[0].mxu0 %v1285
    %v1358 = vpop.f32.mrb[0].mxu0
    %v1359 = vadd.f32 0.0, %v1358
    %v1360 = vpop.f32.mrb[0].mxu0
    %1361 = vdwg.mxu0
    %v1362 = vadd.f32 %v1278, %v1354
    %v1363 = vadd.f32 %v1279, %v1359
    %1364 = vst.msk [vmem:[#allocation2] sm:$0xff] %vm381, %v1362
    %1365 = vst.msk [vmem:[#allocation2 + $0x8] sm:$0xff] %vm381, %v1363
    // Predicated region
    $region78: #{tpu_custom_call.1} parent=1 // pred_check
      %p1366 = pneg %p85
    $region79: #{tpu_custom_call.1} parent=1 // pred_check_branch
      %1368 = sbr.rel (%p1366) target = $region81
    $region80: #{tpu_custom_call.1} parent=1 // pred_region
      %v1369 = vld [vmem:[#allocation2] sm:$0xff]
      %v1370 = vld [vmem:[#allocation2 + $0x8] sm:$0xff]
      %1371 = vst.msk [vmem:[#allocation3] sm:$0xff] %vm381, %v1369
      %1372 = vst.msk [vmem:[#allocation3 + $0x8] sm:$0xff] %vm381, %v1370
    $region81: #{tpu_custom_call.1} parent=1 // pred_fallthru
      _
    // Predicated region
    $region82: #{tpu_custom_call.1} parent=1 // pred_check
      _
    $region83: #{tpu_custom_call.1} parent=1 // pred_check_branch
      %1374 = sbr.rel (0) target = $region85
    $region84: #{tpu_custom_call.1} parent=1 // pred_region
      %s1376 = ssub.s32 256, 256
      %1377 = vsyncadd [#allocation4], %s1376
      %s1378 = sshll.u32 [#allocation3], 4
      %s1379 = int_to_ptr.vmem [resolvable:$true] %s1378
      %1384 = dma.vmem_to_hbm [thread:$0]  %s1379, 256, %s18, [#allocation4], 128, 128, 8
    $region85: #{tpu_custom_call.1} parent=1 // pred_fallthru
      _
    // Predicated region
    $region86: #{tpu_custom_call.1} parent=1 // pred_check
      _
    $region87: #{tpu_custom_call.1} parent=1 // pred_check_branch
      %1386 = sbr.rel (0) target = $region89
    $region88: #{tpu_custom_call.1} parent=1 // pred_region
      %1387 = dma.done [#allocation4], 256
    $region89: #{tpu_custom_call.1} parent=1 // pred_fallthru
      _
    %1388 = vsyncpa [#allocation4], 1

</llo_original>
